<compile_context>
chip_gen: v6e
topology: v6e:2x2x1
jax: 0.10.0
libtpu: 0.0.40
codegen_flags: <defaults>
</compile_context>

<pallas_src>
import jax
import jax.numpy as jnp
from jax import lax
from jax.experimental import pallas as pl
from jax.experimental.pallas import tpu as pltpu

NEG_SLOPE = 0.01   # PyTorch nn.LeakyReLU default
BN_EPS = 1e-5


def _leaky_relu(x):
    return jnp.where(x >= 0, x, NEG_SLOPE * x)


def _fill_taps(p_ref, src_ref, ml_ref, mr_ref, C, H, W):
    """im2col for a 3x3 / pad-1 conv in channel-first layout.

    src_ref : (C, H*W) activation ref, flattened spatial on the lane axis.
    p_ref   : (9*C, H*W) scratch; row block t*C:(t+1)*C gets the input shifted by
              tap t = ky*3 + kx, with zeros where the 3x3 window leaves the image.
    ml_ref / mr_ref : (1, H*W) host-built masks that zero the lanes where a +/-1
              column shift would wrap across an image row.
    """
    HW = H * W
    for ky in range(3):
        for kx in range(3):
            t = ky * 3 + kx
            shift = (ky - 1) * W + (kx - 1)        # flat-index shift for this tap
            r0 = t * C
            dst_lo = max(0, -shift)
            dst_hi = HW - max(0, shift)
            # shifted read straight from the ref (static, clipped lane window)
            val = src_ref[:, dst_lo + shift:dst_hi + shift]
            if kx == 0:                            # reads column w-1 -> kill w==0 lanes
                val = val * ml_ref[:, dst_lo:dst_hi]
            elif kx == 2:                          # reads column w+1 -> kill w==W-1 lanes
                val = val * mr_ref[:, dst_lo:dst_hi]
            p_ref[r0:r0 + C, dst_lo:dst_hi] = val
            # rows of the 3x3 window that fall above/below the image -> zero halo strips
            if dst_lo > 0:
                p_ref[r0:r0 + C, 0:dst_lo] = jnp.zeros((C, dst_lo), jnp.float32)
            if dst_hi < HW:
                p_ref[r0:r0 + C, dst_hi:HW] = jnp.zeros((C, HW - dst_hi), jnp.float32)


def double_conv3x3(x_nchw, w1m, b1, w2m, b2):
    """x_nchw: (N, Cin, H, W) f32.  w1m: (Cmid, 9*Cin), b1: (Cmid, 1),
    w2m: (Cout, 9*Cmid), b2: (Cout, 1)  (BN scale already folded into the weights).
    Returns (N, Cout, H, W)."""
    N, Cin, H, W = x_nchw.shape
    HW = H * W
    Cmid = w1m.shape[0]
    Cout = w2m.shape[0]

    # NCHW is already channel-first: flattening the spatial dims is a free reshape.
    x = x_nchw.reshape(N, Cin, HW)

    # Host-precomputed masks for the +/-1 column shifts (kill row-wrap lanes).
    col = jnp.arange(HW, dtype=jnp.int32) % W
    mask_l = (col != 0).astype(jnp.float32)[None, :]       # (1, HW)
    mask_r = (col != W - 1).astype(jnp.float32)[None, :]   # (1, HW)

    def kernel(x_ref, w1_ref, b1_ref, w2_ref, b2_ref, ml_ref, mr_ref,
               o_ref, p1_ref, p2_ref, y_ref):
        # ---- conv1: im2col into (9*Cin, HW) then a single MXU matmul ----
        _fill_taps(p1_ref, x_ref, ml_ref, mr_ref, Cin, H, W)
        a1 = jnp.dot(w1_ref[...], p1_ref[...],
                     preferred_element_type=jnp.float32)    # (Cmid, HW)
        y_ref[...] = _leaky_relu(a1 + b1_ref[...])           # folded BN bias + LeakyReLU

        # ---- conv2: im2col of the intermediate, single matmul ----
        _fill_taps(p2_ref, y_ref, ml_ref, mr_ref, Cmid, H, W)
        a2 = jnp.dot(w2_ref[...], p2_ref[...],
                     preferred_element_type=jnp.float32)    # (Cout, HW)
        o_ref[...] = _leaky_relu(a2 + b2_ref[...]).astype(o_ref.dtype)

    out = pl.pallas_call(
        kernel,
        out_shape=jax.ShapeDtypeStruct((N, Cout, HW), jnp.float32),
        grid_spec=pltpu.PrefetchScalarGridSpec(
            num_scalar_prefetch=0,
            grid=(N,),
            in_specs=[
                pl.BlockSpec((None, Cin, HW), lambda n: (n, 0, 0)),   # x (lane-dense)
                pl.BlockSpec((Cmid, 9 * Cin), lambda n: (0, 0)),      # w1 (scale folded)
                pl.BlockSpec((Cmid, 1), lambda n: (0, 0)),            # b1
                pl.BlockSpec((Cout, 9 * Cmid), lambda n: (0, 0)),     # w2
                pl.BlockSpec((Cout, 1), lambda n: (0, 0)),            # b2
                pl.BlockSpec((1, HW), lambda n: (0, 0)),              # mask_l
                pl.BlockSpec((1, HW), lambda n: (0, 0)),              # mask_r
            ],
            out_specs=pl.BlockSpec((None, Cout, HW), lambda n: (n, 0, 0)),
            scratch_shapes=[
                pltpu.VMEM((9 * Cin, HW), jnp.float32),    # conv1 im2col buffer
                pltpu.VMEM((9 * Cmid, HW), jnp.float32),   # conv2 im2col buffer
                pltpu.VMEM((Cmid, HW), jnp.float32),       # intermediate activation
            ],
        ),
        compiler_params=pltpu.CompilerParams(
            dimension_semantics=("parallel",)),            # v7x: shard batch over 2 TCs
    )(x, w1m, b1, w2m, b2, mask_l, mask_r)

    return out.reshape(N, Cout, H, W)                       # free reshape, already NCHW


def _prep_conv_bn(wk, conv_bias, gamma, beta, mean, var):
    """PyTorch OIHW conv weight + eval-mode BN  ->  (Cout, 9*Cin) matrix with the
    BN scale folded into the weights, plus a (Cout, 1) folded bias."""
    cout = wk.shape[0]
    scale = gamma / jnp.sqrt(var + BN_EPS)                           # (Cout,)
    w = wk * scale[:, None, None, None]                              # fold scale
    wmat = jnp.transpose(w, (0, 2, 3, 1)).reshape(cout, -1)          # (Cout, ky*kx*Cin)
    bias = beta + scale * (conv_bias - mean)
    return wmat, bias[:, None]


def _reference(x_nchw, wk1, cb1, g1, be1, m1, v1, wk2, cb2, g2, be2, m2, v2):
    """Pure-JAX reference (NCHW, OIHW) for correctness checking."""
    def block(x, wk, cb, g, be, m, v):
        y = lax.conv_general_dilated(
            x, wk, window_strides=(1, 1), padding=((1, 1), (1, 1)),
            dimension_numbers=("NCHW", "OIHW", "NCHW"))
        y = y + cb[None, :, None, None]
        y = (y - m[None, :, None, None]) / jnp.sqrt(v[None, :, None, None] + BN_EPS)
        y = y * g[None, :, None, None] + be[None, :, None, None]
        return jnp.where(y >= 0, y, NEG_SLOPE * y)
    y = block(x_nchw, wk1, cb1, g1, be1, m1, v1)
    return block(y, wk2, cb2, g2, be2, m2, v2)


if __name__ == "__main__":
    N, Cin, Cmid_out, H, W = 2, 4, 8, 16, 16  # out_channels = 8 for both convs

    key = jax.random.PRNGKey(0)
    keys = jax.random.split(key, 13)

    x = jax.random.normal(keys[0], (N, Cin, H, W), jnp.float32)

    # conv1 params (PyTorch layout OIHW), BN1 params
    wk1 = jax.random.normal(keys[1], (Cmid_out, Cin, 3, 3), jnp.float32) * 0.1
    cb1 = jax.random.normal(keys[2], (Cmid_out,), jnp.float32) * 0.1
    g1 = 1.0 + 0.1 * jax.random.normal(keys[3], (Cmid_out,), jnp.float32)
    be1 = 0.1 * jax.random.normal(keys[4], (Cmid_out,), jnp.float32)
    m1 = 0.1 * jax.random.normal(keys[5], (Cmid_out,), jnp.float32)
    v1 = 1.0 + 0.1 * jnp.abs(jax.random.normal(keys[6], (Cmid_out,), jnp.float32))

    # conv2 params, BN2 params
    wk2 = jax.random.normal(keys[7], (Cmid_out, Cmid_out, 3, 3), jnp.float32) * 0.1
    cb2 = jax.random.normal(keys[8], (Cmid_out,), jnp.float32) * 0.1
    g2 = 1.0 + 0.1 * jax.random.normal(keys[9], (Cmid_out,), jnp.float32)
    be2 = 0.1 * jax.random.normal(keys[10], (Cmid_out,), jnp.float32)
    m2 = 0.1 * jax.random.normal(keys[11], (Cmid_out,), jnp.float32)
    v2 = 1.0 + 0.1 * jnp.abs(jax.random.normal(keys[12], (Cmid_out,), jnp.float32))

    # Kernel-side parameter prep: fold conv bias + BN into (Cout, 9*Cin) weight mats.
    w1m, b1 = _prep_conv_bn(wk1, cb1, g1, be1, m1, v1)
    w2m, b2 = _prep_conv_bn(wk2, cb2, g2, be2, m2, v2)

    out = double_conv3x3(x, w1m, b1, w2m, b2)
    out = jax.block_until_ready(out)

    ref = _reference(x, wk1, cb1, g1, be1, m1, v1, wk2, cb2, g2, be2, m2, v2)
    assert out.shape == (N, Cmid_out, H, W)
    assert jnp.allclose(out, ref, atol=1e-4, rtol=1e-4), \
        f"max abs err {jnp.max(jnp.abs(out - ref))}"

    print("KERNEL_OK")
</pallas_src>

<mosaic_0001>
module attributes {stable_mosaic.version = 11 : i64} {
  func.func @kernel(%arg0: i32, %arg1: memref<1x4x256xf32, #tpu.memory_space<vmem>>, %arg2: memref<8x36xf32, #tpu.memory_space<vmem>>, %arg3: memref<8x1xf32, #tpu.memory_space<vmem>>, %arg4: memref<8x72xf32, #tpu.memory_space<vmem>>, %arg5: memref<8x1xf32, #tpu.memory_space<vmem>>, %arg6: memref<1x256xf32, #tpu.memory_space<vmem>>, %arg7: memref<1x256xf32, #tpu.memory_space<vmem>>, %arg8: memref<1x8x256xf32, #tpu.memory_space<vmem>>, %arg9: memref<36x256xf32, #tpu.memory_space<vmem>>, %arg10: memref<72x256xf32, #tpu.memory_space<vmem>>, %arg11: memref<8x256xf32, #tpu.memory_space<vmem>>) attributes {dimension_semantics = [#tpu.dimension_semantics<parallel>], iteration_bounds = array<i64: 2>, scalar_prefetch = 0 : i64, scratch_operands = 3 : i64, tpu.core_type = #tpu.core_type<tc>, window_params = [{transform_indices = @transform_0, window_bounds = array<i64: 1, 4, 256>}, {pipeline_mode = #tpu.pipeline_mode<synchronous>, transform_indices = @transform_1, window_bounds = array<i64: 8, 36>}, {pipeline_mode = #tpu.pipeline_mode<synchronous>, transform_indices = @transform_2, window_bounds = array<i64: 8, 1>}, {pipeline_mode = #tpu.pipeline_mode<synchronous>, transform_indices = @transform_3, window_bounds = array<i64: 8, 72>}, {pipeline_mode = #tpu.pipeline_mode<synchronous>, transform_indices = @transform_4, window_bounds = array<i64: 8, 1>}, {pipeline_mode = #tpu.pipeline_mode<synchronous>, transform_indices = @transform_5, window_bounds = array<i64: 1, 256>}, {pipeline_mode = #tpu.pipeline_mode<synchronous>, transform_indices = @transform_6, window_bounds = array<i64: 1, 256>}, {transform_indices = @transform_7, window_bounds = array<i64: 1, 8, 256>}]} {
    %c0 = arith.constant 0 : index
    %c0_0 = arith.constant 0 : index
    %c0_1 = arith.constant 0 : index
    %0 = vector.load %arg1[%c0, %c0_0, %c0_1] : memref<1x4x256xf32, #tpu.memory_space<vmem>>, vector<1x4x239xf32>
    %1 = vector.shape_cast %0 : vector<1x4x239xf32> to vector<4x239xf32>
    %c0_2 = arith.constant 0 : index
    %c17 = arith.constant 17 : index
    %2 = vector.load %arg6[%c0_2, %c17] : memref<1x256xf32, #tpu.memory_space<vmem>>, vector<1x239xf32>
    %3 = vector.broadcast %2 : vector<1x239xf32> to vector<4x239xf32>
    %4 = arith.mulf %1, %3 : vector<4x239xf32>
    %c0_3 = arith.constant 0 : index
    %c17_4 = arith.constant 17 : index
    %5 = vector.load %arg9[%c0_3, %c17_4] : memref<36x256xf32, #tpu.memory_space<vmem>>, vector<4x239xf32>
    tpu.vector_store %arg9[%c0_3, %c17_4], %4 {strides = array<i32>} : memref<36x256xf32, #tpu.memory_space<vmem>>, vector<4x239xf32>,
    %cst = arith.constant 0.000000e+00 : f32
    %6 = vector.broadcast %cst : f32 to vector<4x17xf32>
    %c0_5 = arith.constant 0 : index
    %c0_6 = arith.constant 0 : index
    %7 = vector.load %arg9[%c0_5, %c0_6] : memref<36x256xf32, #tpu.memory_space<vmem>>, vector<4x17xf32>
    tpu.vector_store %arg9[%c0_5, %c0_6], %6 {strides = array<i32>} : memref<36x256xf32, #tpu.memory_space<vmem>>, vector<4x17xf32>,
    %c0_7 = arith.constant 0 : index
    %c0_8 = arith.constant 0 : index
    %c0_9 = arith.constant 0 : index
    %8 = vector.load %arg1[%c0_7, %c0_8, %c0_9] : memref<1x4x256xf32, #tpu.memory_space<vmem>>, vector<1x4x240xf32>
    %9 = vector.shape_cast %8 : vector<1x4x240xf32> to vector<4x240xf32>
    %c4 = arith.constant 4 : index
    %c16 = arith.constant 16 : index
    %10 = vector.load %arg9[%c4, %c16] : memref<36x256xf32, #tpu.memory_space<vmem>>, vector<4x240xf32>
    tpu.vector_store %arg9[%c4, %c16], %9 {strides = array<i32>} : memref<36x256xf32, #tpu.memory_space<vmem>>, vector<4x240xf32>,
    %cst_10 = arith.constant 0.000000e+00 : f32
    %11 = vector.broadcast %cst_10 : f32 to vector<4x16xf32>
    %c4_11 = arith.constant 4 : index
    %c0_12 = arith.constant 0 : index
    %12 = vector.load %arg9[%c4_11, %c0_12] : memref<36x256xf32, #tpu.memory_space<vmem>>, vector<4x16xf32>
    tpu.vector_store %arg9[%c4_11, %c0_12], %11 {strides = array<i32>} : memref<36x256xf32, #tpu.memory_space<vmem>>, vector<4x16xf32>,
    %c0_13 = arith.constant 0 : index
    %c0_14 = arith.constant 0 : index
    %c0_15 = arith.constant 0 : index
    %13 = vector.load %arg1[%c0_13, %c0_14, %c0_15] : memref<1x4x256xf32, #tpu.memory_space<vmem>>, vector<1x4x241xf32>
    %14 = vector.shape_cast %13 : vector<1x4x241xf32> to vector<4x241xf32>
    %c0_16 = arith.constant 0 : index
    %c15 = arith.constant 15 : index
    %15 = vector.load %arg7[%c0_16, %c15] : memref<1x256xf32, #tpu.memory_space<vmem>>, vector<1x241xf32>
    %16 = vector.broadcast %15 : vector<1x241xf32> to vector<4x241xf32>
    %17 = arith.mulf %14, %16 : vector<4x241xf32>
    %c8 = arith.constant 8 : index
    %c15_17 = arith.constant 15 : index
    %18 = vector.load %arg9[%c8, %c15_17] : memref<36x256xf32, #tpu.memory_space<vmem>>, vector<4x241xf32>
    tpu.vector_store %arg9[%c8, %c15_17], %17 {strides = array<i32>} : memref<36x256xf32, #tpu.memory_space<vmem>>, vector<4x241xf32>,
    %cst_18 = arith.constant 0.000000e+00 : f32
    %19 = vector.broadcast %cst_18 : f32 to vector<4x15xf32>
    %c8_19 = arith.constant 8 : index
    %c0_20 = arith.constant 0 : index
    %20 = vector.load %arg9[%c8_19, %c0_20] : memref<36x256xf32, #tpu.memory_space<vmem>>, vector<4x15xf32>
    tpu.vector_store %arg9[%c8_19, %c0_20], %19 {strides = array<i32>} : memref<36x256xf32, #tpu.memory_space<vmem>>, vector<4x15xf32>,
    %c0_21 = arith.constant 0 : index
    %c0_22 = arith.constant 0 : index
    %c0_23 = arith.constant 0 : index
    %21 = vector.load %arg1[%c0_21, %c0_22, %c0_23] : memref<1x4x256xf32, #tpu.memory_space<vmem>>, vector<1x4x255xf32>
    %22 = vector.shape_cast %21 : vector<1x4x255xf32> to vector<4x255xf32>
    %c0_24 = arith.constant 0 : index
    %c1 = arith.constant 1 : index
    %23 = vector.load %arg6[%c0_24, %c1] : memref<1x256xf32, #tpu.memory_space<vmem>>, vector<1x255xf32>
    %24 = vector.broadcast %23 : vector<1x255xf32> to vector<4x255xf32>
    %25 = arith.mulf %22, %24 : vector<4x255xf32>
    %c12 = arith.constant 12 : index
    %c1_25 = arith.constant 1 : index
    %26 = vector.load %arg9[%c12, %c1_25] : memref<36x256xf32, #tpu.memory_space<vmem>>, vector<4x255xf32>
    tpu.vector_store %arg9[%c12, %c1_25], %25 {strides = array<i32>} : memref<36x256xf32, #tpu.memory_space<vmem>>, vector<4x255xf32>,
    %cst_26 = arith.constant 0.000000e+00 : f32
    %27 = vector.broadcast %cst_26 : f32 to vector<4x1xf32>
    %c12_27 = arith.constant 12 : index
    %c0_28 = arith.constant 0 : index
    %28 = vector.load %arg9[%c12_27, %c0_28] : memref<36x256xf32, #tpu.memory_space<vmem>>, vector<4x1xf32>
    tpu.vector_store %arg9[%c12_27, %c0_28], %27 {strides = array<i32>} : memref<36x256xf32, #tpu.memory_space<vmem>>, vector<4x1xf32>,
    %c0_29 = arith.constant 0 : index
    %c0_30 = arith.constant 0 : index
    %c0_31 = arith.constant 0 : index
    %29 = vector.load %arg1[%c0_29, %c0_30, %c0_31] : memref<1x4x256xf32, #tpu.memory_space<vmem>>, vector<1x4x256xf32>
    %30 = vector.shape_cast %29 : vector<1x4x256xf32> to vector<4x256xf32>
    %c16_32 = arith.constant 16 : index
    %c0_33 = arith.constant 0 : index
    %31 = vector.load %arg9[%c16_32, %c0_33] : memref<36x256xf32, #tpu.memory_space<vmem>>, vector<4x256xf32>
    tpu.vector_store %arg9[%c16_32, %c0_33], %30 {strides = array<i32>} : memref<36x256xf32, #tpu.memory_space<vmem>>, vector<4x256xf32>,
    %c0_34 = arith.constant 0 : index
    %c0_35 = arith.constant 0 : index
    %c1_36 = arith.constant 1 : index
    %32 = vector.load %arg1[%c0_34, %c0_35, %c1_36] : memref<1x4x256xf32, #tpu.memory_space<vmem>>, vector<1x4x255xf32>
    %33 = vector.shape_cast %32 : vector<1x4x255xf32> to vector<4x255xf32>
    %c0_37 = arith.constant 0 : index
    %c0_38 = arith.constant 0 : index
    %34 = vector.load %arg7[%c0_37, %c0_38] : memref<1x256xf32, #tpu.memory_space<vmem>>, vector<1x255xf32>
    %35 = vector.broadcast %34 : vector<1x255xf32> to vector<4x255xf32>
    %36 = arith.mulf %33, %35 : vector<4x255xf32>
    %c20 = arith.constant 20 : index
    %c0_39 = arith.constant 0 : index
    %37 = vector.load %arg9[%c20, %c0_39] : memref<36x256xf32, #tpu.memory_space<vmem>>, vector<4x255xf32>
    tpu.vector_store %arg9[%c20, %c0_39], %36 {strides = array<i32>} : memref<36x256xf32, #tpu.memory_space<vmem>>, vector<4x255xf32>,
    %cst_40 = arith.constant 0.000000e+00 : f32
    %38 = vector.broadcast %cst_40 : f32 to vector<4x1xf32>
    %c20_41 = arith.constant 20 : index
    %c255 = arith.constant 255 : index
    %39 = vector.load %arg9[%c20_41, %c255] : memref<36x256xf32, #tpu.memory_space<vmem>>, vector<4x1xf32>
    tpu.vector_store %arg9[%c20_41, %c255], %38 {strides = array<i32>} : memref<36x256xf32, #tpu.memory_space<vmem>>, vector<4x1xf32>,
    %c0_42 = arith.constant 0 : index
    %c0_43 = arith.constant 0 : index
    %c15_44 = arith.constant 15 : index
    %40 = vector.load %arg1[%c0_42, %c0_43, %c15_44] : memref<1x4x256xf32, #tpu.memory_space<vmem>>, vector<1x4x241xf32>
    %41 = vector.shape_cast %40 : vector<1x4x241xf32> to vector<4x241xf32>
    %c0_45 = arith.constant 0 : index
    %c0_46 = arith.constant 0 : index
    %42 = vector.load %arg6[%c0_45, %c0_46] : memref<1x256xf32, #tpu.memory_space<vmem>>, vector<1x241xf32>
    %43 = vector.broadcast %42 : vector<1x241xf32> to vector<4x241xf32>
    %44 = arith.mulf %41, %43 : vector<4x241xf32>
    %c24 = arith.constant 24 : index
    %c0_47 = arith.constant 0 : index
    %45 = vector.load %arg9[%c24, %c0_47] : memref<36x256xf32, #tpu.memory_space<vmem>>, vector<4x241xf32>
    tpu.vector_store %arg9[%c24, %c0_47], %44 {strides = array<i32>} : memref<36x256xf32, #tpu.memory_space<vmem>>, vector<4x241xf32>,
    %cst_48 = arith.constant 0.000000e+00 : f32
    %46 = vector.broadcast %cst_48 : f32 to vector<4x15xf32>
    %c24_49 = arith.constant 24 : index
    %c241 = arith.constant 241 : index
    %47 = vector.load %arg9[%c24_49, %c241] : memref<36x256xf32, #tpu.memory_space<vmem>>, vector<4x15xf32>
    tpu.vector_store %arg9[%c24_49, %c241], %46 {strides = array<i32>} : memref<36x256xf32, #tpu.memory_space<vmem>>, vector<4x15xf32>,
    %c0_50 = arith.constant 0 : index
    %c0_51 = arith.constant 0 : index
    %c16_52 = arith.constant 16 : index
    %48 = vector.load %arg1[%c0_50, %c0_51, %c16_52] : memref<1x4x256xf32, #tpu.memory_space<vmem>>, vector<1x4x240xf32>
    %49 = vector.shape_cast %48 : vector<1x4x240xf32> to vector<4x240xf32>
    %c28 = arith.constant 28 : index
    %c0_53 = arith.constant 0 : index
    %50 = vector.load %arg9[%c28, %c0_53] : memref<36x256xf32, #tpu.memory_space<vmem>>, vector<4x240xf32>
    tpu.vector_store %arg9[%c28, %c0_53], %49 {strides = array<i32>} : memref<36x256xf32, #tpu.memory_space<vmem>>, vector<4x240xf32>,
    %cst_54 = arith.constant 0.000000e+00 : f32
    %51 = vector.broadcast %cst_54 : f32 to vector<4x16xf32>
    %c28_55 = arith.constant 28 : index
    %c240 = arith.constant 240 : index
    %52 = vector.load %arg9[%c28_55, %c240] : memref<36x256xf32, #tpu.memory_space<vmem>>, vector<4x16xf32>
    tpu.vector_store %arg9[%c28_55, %c240], %51 {strides = array<i32>} : memref<36x256xf32, #tpu.memory_space<vmem>>, vector<4x16xf32>,
    %c0_56 = arith.constant 0 : index
    %c0_57 = arith.constant 0 : index
    %c17_58 = arith.constant 17 : index
    %53 = vector.load %arg1[%c0_56, %c0_57, %c17_58] : memref<1x4x256xf32, #tpu.memory_space<vmem>>, vector<1x4x239xf32>
    %54 = vector.shape_cast %53 : vector<1x4x239xf32> to vector<4x239xf32>
    %c0_59 = arith.constant 0 : index
    %c0_60 = arith.constant 0 : index
    %55 = vector.load %arg7[%c0_59, %c0_60] : memref<1x256xf32, #tpu.memory_space<vmem>>, vector<1x239xf32>
    %56 = vector.broadcast %55 : vector<1x239xf32> to vector<4x239xf32>
    %57 = arith.mulf %54, %56 : vector<4x239xf32>
    %c32 = arith.constant 32 : index
    %c0_61 = arith.constant 0 : index
    %58 = vector.load %arg9[%c32, %c0_61] : memref<36x256xf32, #tpu.memory_space<vmem>>, vector<4x239xf32>
    tpu.vector_store %arg9[%c32, %c0_61], %57 {strides = array<i32>} : memref<36x256xf32, #tpu.memory_space<vmem>>, vector<4x239xf32>,
    %cst_62 = arith.constant 0.000000e+00 : f32
    %59 = vector.broadcast %cst_62 : f32 to vector<4x17xf32>
    %c32_63 = arith.constant 32 : index
    %c239 = arith.constant 239 : index
    %60 = vector.load %arg9[%c32_63, %c239] : memref<36x256xf32, #tpu.memory_space<vmem>>, vector<4x17xf32>
    tpu.vector_store %arg9[%c32_63, %c239], %59 {strides = array<i32>} : memref<36x256xf32, #tpu.memory_space<vmem>>, vector<4x17xf32>,
    %c0_64 = arith.constant 0 : index
    %c0_65 = arith.constant 0 : index
    %61 = vector.load %arg2[%c0_64, %c0_65] : memref<8x36xf32, #tpu.memory_space<vmem>>, vector<8x36xf32>
    %c0_66 = arith.constant 0 : index
    %c0_67 = arith.constant 0 : index
    %62 = vector.load %arg9[%c0_66, %c0_67] : memref<36x256xf32, #tpu.memory_space<vmem>>, vector<36x256xf32>
    %cst_68 = arith.constant dense<0.000000e+00> : vector<8x256xf32>
    %63 = tpu.matmul %61, %62, %cst_68 {dimension_numbers = #tpu.dot_dimension_numbers<[1], [0], [0], [1], [0, 0, 1, 1], [], []>} : vector<8x36xf32>, vector<36x256xf32>, vector<8x256xf32> -> vector<8x256xf32>
    %c0_69 = arith.constant 0 : index
    %c0_70 = arith.constant 0 : index
    %64 = vector.load %arg3[%c0_69, %c0_70] : memref<8x1xf32, #tpu.memory_space<vmem>>, vector<8x1xf32>
    %65 = vector.broadcast %64 : vector<8x1xf32> to vector<8x256xf32>
    %66 = arith.addf %63, %65 : vector<8x256xf32>
    %cst_71 = arith.constant 0.000000e+00 : f32
    %67 = vector.broadcast %cst_71 : f32 to vector<8x256xf32>
    %68 = arith.cmpf oge, %66, %67 : vector<8x256xf32>
    %cst_72 = arith.constant 0.00999999977 : f32
    %69 = vector.broadcast %cst_72 : f32 to vector<8x256xf32>
    %70 = arith.mulf %69, %66 : vector<8x256xf32>
    %71 = arith.select %68, %66, %70 : vector<8x256xi1>, vector<8x256xf32>
    %c0_73 = arith.constant 0 : index
    %c0_74 = arith.constant 0 : index
    %72 = vector.load %arg11[%c0_73, %c0_74] : memref<8x256xf32, #tpu.memory_space<vmem>>, vector<8x256xf32>
    tpu.vector_store %arg11[%c0_73, %c0_74], %71 {strides = array<i32>} : memref<8x256xf32, #tpu.memory_space<vmem>>, vector<8x256xf32>,
    %c0_75 = arith.constant 0 : index
    %c0_76 = arith.constant 0 : index
    %73 = vector.load %arg11[%c0_75, %c0_76] : memref<8x256xf32, #tpu.memory_space<vmem>>, vector<8x239xf32>
    %c0_77 = arith.constant 0 : index
    %c17_78 = arith.constant 17 : index
    %74 = vector.load %arg6[%c0_77, %c17_78] : memref<1x256xf32, #tpu.memory_space<vmem>>, vector<1x239xf32>
    %75 = vector.broadcast %74 : vector<1x239xf32> to vector<8x239xf32>
    %76 = arith.mulf %73, %75 : vector<8x239xf32>
    %c0_79 = arith.constant 0 : index
    %c17_80 = arith.constant 17 : index
    %77 = vector.load %arg10[%c0_79, %c17_80] : memref<72x256xf32, #tpu.memory_space<vmem>>, vector<8x239xf32>
    tpu.vector_store %arg10[%c0_79, %c17_80], %76 {strides = array<i32>} : memref<72x256xf32, #tpu.memory_space<vmem>>, vector<8x239xf32>,
    %cst_81 = arith.constant 0.000000e+00 : f32
    %78 = vector.broadcast %cst_81 : f32 to vector<8x17xf32>
    %c0_82 = arith.constant 0 : index
    %c0_83 = arith.constant 0 : index
    %79 = vector.load %arg10[%c0_82, %c0_83] : memref<72x256xf32, #tpu.memory_space<vmem>>, vector<8x17xf32>
    tpu.vector_store %arg10[%c0_82, %c0_83], %78 {strides = array<i32>} : memref<72x256xf32, #tpu.memory_space<vmem>>, vector<8x17xf32>,
    %c0_84 = arith.constant 0 : index
    %c0_85 = arith.constant 0 : index
    %80 = vector.load %arg11[%c0_84, %c0_85] : memref<8x256xf32, #tpu.memory_space<vmem>>, vector<8x240xf32>
    %c8_86 = arith.constant 8 : index
    %c16_87 = arith.constant 16 : index
    %81 = vector.load %arg10[%c8_86, %c16_87] : memref<72x256xf32, #tpu.memory_space<vmem>>, vector<8x240xf32>
    tpu.vector_store %arg10[%c8_86, %c16_87], %80 {strides = array<i32>} : memref<72x256xf32, #tpu.memory_space<vmem>>, vector<8x240xf32>,
    %cst_88 = arith.constant 0.000000e+00 : f32
    %82 = vector.broadcast %cst_88 : f32 to vector<8x16xf32>
    %c8_89 = arith.constant 8 : index
    %c0_90 = arith.constant 0 : index
    %83 = vector.load %arg10[%c8_89, %c0_90] : memref<72x256xf32, #tpu.memory_space<vmem>>, vector<8x16xf32>
    tpu.vector_store %arg10[%c8_89, %c0_90], %82 {strides = array<i32>} : memref<72x256xf32, #tpu.memory_space<vmem>>, vector<8x16xf32>,
    %c0_91 = arith.constant 0 : index
    %c0_92 = arith.constant 0 : index
    %84 = vector.load %arg11[%c0_91, %c0_92] : memref<8x256xf32, #tpu.memory_space<vmem>>, vector<8x241xf32>
    %c0_93 = arith.constant 0 : index
    %c15_94 = arith.constant 15 : index
    %85 = vector.load %arg7[%c0_93, %c15_94] : memref<1x256xf32, #tpu.memory_space<vmem>>, vector<1x241xf32>
    %86 = vector.broadcast %85 : vector<1x241xf32> to vector<8x241xf32>
    %87 = arith.mulf %84, %86 : vector<8x241xf32>
    %c16_95 = arith.constant 16 : index
    %c15_96 = arith.constant 15 : index
    %88 = vector.load %arg10[%c16_95, %c15_96] : memref<72x256xf32, #tpu.memory_space<vmem>>, vector<8x241xf32>
    tpu.vector_store %arg10[%c16_95, %c15_96], %87 {strides = array<i32>} : memref<72x256xf32, #tpu.memory_space<vmem>>, vector<8x241xf32>,
    %cst_97 = arith.constant 0.000000e+00 : f32
    %89 = vector.broadcast %cst_97 : f32 to vector<8x15xf32>
    %c16_98 = arith.constant 16 : index
    %c0_99 = arith.constant 0 : index
    %90 = vector.load %arg10[%c16_98, %c0_99] : memref<72x256xf32, #tpu.memory_space<vmem>>, vector<8x15xf32>
    tpu.vector_store %arg10[%c16_98, %c0_99], %89 {strides = array<i32>} : memref<72x256xf32, #tpu.memory_space<vmem>>, vector<8x15xf32>,
    %c0_100 = arith.constant 0 : index
    %c0_101 = arith.constant 0 : index
    %91 = vector.load %arg11[%c0_100, %c0_101] : memref<8x256xf32, #tpu.memory_space<vmem>>, vector<8x255xf32>
    %c0_102 = arith.constant 0 : index
    %c1_103 = arith.constant 1 : index
    %92 = vector.load %arg6[%c0_102, %c1_103] : memref<1x256xf32, #tpu.memory_space<vmem>>, vector<1x255xf32>
    %93 = vector.broadcast %92 : vector<1x255xf32> to vector<8x255xf32>
    %94 = arith.mulf %91, %93 : vector<8x255xf32>
    %c24_104 = arith.constant 24 : index
    %c1_105 = arith.constant 1 : index
    %95 = vector.load %arg10[%c24_104, %c1_105] : memref<72x256xf32, #tpu.memory_space<vmem>>, vector<8x255xf32>
    tpu.vector_store %arg10[%c24_104, %c1_105], %94 {strides = array<i32>} : memref<72x256xf32, #tpu.memory_space<vmem>>, vector<8x255xf32>,
    %cst_106 = arith.constant 0.000000e+00 : f32
    %96 = vector.broadcast %cst_106 : f32 to vector<8x1xf32>
    %c24_107 = arith.constant 24 : index
    %c0_108 = arith.constant 0 : index
    %97 = vector.load %arg10[%c24_107, %c0_108] : memref<72x256xf32, #tpu.memory_space<vmem>>, vector<8x1xf32>
    tpu.vector_store %arg10[%c24_107, %c0_108], %96 {strides = array<i32>} : memref<72x256xf32, #tpu.memory_space<vmem>>, vector<8x1xf32>,
    %c0_109 = arith.constant 0 : index
    %c0_110 = arith.constant 0 : index
    %98 = vector.load %arg11[%c0_109, %c0_110] : memref<8x256xf32, #tpu.memory_space<vmem>>, vector<8x256xf32>
    %c32_111 = arith.constant 32 : index
    %c0_112 = arith.constant 0 : index
    %99 = vector.load %arg10[%c32_111, %c0_112] : memref<72x256xf32, #tpu.memory_space<vmem>>, vector<8x256xf32>
    tpu.vector_store %arg10[%c32_111, %c0_112], %98 {strides = array<i32>} : memref<72x256xf32, #tpu.memory_space<vmem>>, vector<8x256xf32>,
    %c0_113 = arith.constant 0 : index
    %c1_114 = arith.constant 1 : index
    %100 = vector.load %arg11[%c0_113, %c1_114] : memref<8x256xf32, #tpu.memory_space<vmem>>, vector<8x255xf32>
    %c0_115 = arith.constant 0 : index
    %c0_116 = arith.constant 0 : index
    %101 = vector.load %arg7[%c0_115, %c0_116] : memref<1x256xf32, #tpu.memory_space<vmem>>, vector<1x255xf32>
    %102 = vector.broadcast %101 : vector<1x255xf32> to vector<8x255xf32>
    %103 = arith.mulf %100, %102 : vector<8x255xf32>
    %c40 = arith.constant 40 : index
    %c0_117 = arith.constant 0 : index
    %104 = vector.load %arg10[%c40, %c0_117] : memref<72x256xf32, #tpu.memory_space<vmem>>, vector<8x255xf32>
    tpu.vector_store %arg10[%c40, %c0_117], %103 {strides = array<i32>} : memref<72x256xf32, #tpu.memory_space<vmem>>, vector<8x255xf32>,
    %cst_118 = arith.constant 0.000000e+00 : f32
    %105 = vector.broadcast %cst_118 : f32 to vector<8x1xf32>
    %c40_119 = arith.constant 40 : index
    %c255_120 = arith.constant 255 : index
    %106 = vector.load %arg10[%c40_119, %c255_120] : memref<72x256xf32, #tpu.memory_space<vmem>>, vector<8x1xf32>
    tpu.vector_store %arg10[%c40_119, %c255_120], %105 {strides = array<i32>} : memref<72x256xf32, #tpu.memory_space<vmem>>, vector<8x1xf32>,
    %c0_121 = arith.constant 0 : index
    %c15_122 = arith.constant 15 : index
    %107 = vector.load %arg11[%c0_121, %c15_122] : memref<8x256xf32, #tpu.memory_space<vmem>>, vector<8x241xf32>
    %c0_123 = arith.constant 0 : index
    %c0_124 = arith.constant 0 : index
    %108 = vector.load %arg6[%c0_123, %c0_124] : memref<1x256xf32, #tpu.memory_space<vmem>>, vector<1x241xf32>
    %109 = vector.broadcast %108 : vector<1x241xf32> to vector<8x241xf32>
    %110 = arith.mulf %107, %109 : vector<8x241xf32>
    %c48 = arith.constant 48 : index
    %c0_125 = arith.constant 0 : index
    %111 = vector.load %arg10[%c48, %c0_125] : memref<72x256xf32, #tpu.memory_space<vmem>>, vector<8x241xf32>
    tpu.vector_store %arg10[%c48, %c0_125], %110 {strides = array<i32>} : memref<72x256xf32, #tpu.memory_space<vmem>>, vector<8x241xf32>,
    %cst_126 = arith.constant 0.000000e+00 : f32
    %112 = vector.broadcast %cst_126 : f32 to vector<8x15xf32>
    %c48_127 = arith.constant 48 : index
    %c241_128 = arith.constant 241 : index
    %113 = vector.load %arg10[%c48_127, %c241_128] : memref<72x256xf32, #tpu.memory_space<vmem>>, vector<8x15xf32>
    tpu.vector_store %arg10[%c48_127, %c241_128], %112 {strides = array<i32>} : memref<72x256xf32, #tpu.memory_space<vmem>>, vector<8x15xf32>,
    %c0_129 = arith.constant 0 : index
    %c16_130 = arith.constant 16 : index
    %114 = vector.load %arg11[%c0_129, %c16_130] : memref<8x256xf32, #tpu.memory_space<vmem>>, vector<8x240xf32>
    %c56 = arith.constant 56 : index
    %c0_131 = arith.constant 0 : index
    %115 = vector.load %arg10[%c56, %c0_131] : memref<72x256xf32, #tpu.memory_space<vmem>>, vector<8x240xf32>
    tpu.vector_store %arg10[%c56, %c0_131], %114 {strides = array<i32>} : memref<72x256xf32, #tpu.memory_space<vmem>>, vector<8x240xf32>,
    %cst_132 = arith.constant 0.000000e+00 : f32
    %116 = vector.broadcast %cst_132 : f32 to vector<8x16xf32>
    %c56_133 = arith.constant 56 : index
    %c240_134 = arith.constant 240 : index
    %117 = vector.load %arg10[%c56_133, %c240_134] : memref<72x256xf32, #tpu.memory_space<vmem>>, vector<8x16xf32>
    tpu.vector_store %arg10[%c56_133, %c240_134], %116 {strides = array<i32>} : memref<72x256xf32, #tpu.memory_space<vmem>>, vector<8x16xf32>,
    %c0_135 = arith.constant 0 : index
    %c17_136 = arith.constant 17 : index
    %118 = vector.load %arg11[%c0_135, %c17_136] : memref<8x256xf32, #tpu.memory_space<vmem>>, vector<8x239xf32>
    %c0_137 = arith.constant 0 : index
    %c0_138 = arith.constant 0 : index
    %119 = vector.load %arg7[%c0_137, %c0_138] : memref<1x256xf32, #tpu.memory_space<vmem>>, vector<1x239xf32>
    %120 = vector.broadcast %119 : vector<1x239xf32> to vector<8x239xf32>
    %121 = arith.mulf %118, %120 : vector<8x239xf32>
    %c64 = arith.constant 64 : index
    %c0_139 = arith.constant 0 : index
    %122 = vector.load %arg10[%c64, %c0_139] : memref<72x256xf32, #tpu.memory_space<vmem>>, vector<8x239xf32>
    tpu.vector_store %arg10[%c64, %c0_139], %121 {strides = array<i32>} : memref<72x256xf32, #tpu.memory_space<vmem>>, vector<8x239xf32>,
    %cst_140 = arith.constant 0.000000e+00 : f32
    %123 = vector.broadcast %cst_140 : f32 to vector<8x17xf32>
    %c64_141 = arith.constant 64 : index
    %c239_142 = arith.constant 239 : index
    %124 = vector.load %arg10[%c64_141, %c239_142] : memref<72x256xf32, #tpu.memory_space<vmem>>, vector<8x17xf32>
    tpu.vector_store %arg10[%c64_141, %c239_142], %123 {strides = array<i32>} : memref<72x256xf32, #tpu.memory_space<vmem>>, vector<8x17xf32>,
    %c0_143 = arith.constant 0 : index
    %c0_144 = arith.constant 0 : index
    %125 = vector.load %arg4[%c0_143, %c0_144] : memref<8x72xf32, #tpu.memory_space<vmem>>, vector<8x72xf32>
    %c0_145 = arith.constant 0 : index
    %c0_146 = arith.constant 0 : index
    %126 = vector.load %arg10[%c0_145, %c0_146] : memref<72x256xf32, #tpu.memory_space<vmem>>, vector<72x256xf32>
    %cst_147 = arith.constant dense<0.000000e+00> : vector<8x256xf32>
    %127 = tpu.matmul %125, %126, %cst_147 {dimension_numbers = #tpu.dot_dimension_numbers<[1], [0], [0], [1], [0, 0, 1, 1], [], []>} : vector<8x72xf32>, vector<72x256xf32>, vector<8x256xf32> -> vector<8x256xf32>
    %c0_148 = arith.constant 0 : index
    %c0_149 = arith.constant 0 : index
    %128 = vector.load %arg5[%c0_148, %c0_149] : memref<8x1xf32, #tpu.memory_space<vmem>>, vector<8x1xf32>
    %129 = vector.broadcast %128 : vector<8x1xf32> to vector<8x256xf32>
    %130 = arith.addf %127, %129 : vector<8x256xf32>
    %cst_150 = arith.constant 0.000000e+00 : f32
    %131 = vector.broadcast %cst_150 : f32 to vector<8x256xf32>
    %132 = arith.cmpf oge, %130, %131 : vector<8x256xf32>
    %cst_151 = arith.constant 0.00999999977 : f32
    %133 = vector.broadcast %cst_151 : f32 to vector<8x256xf32>
    %134 = arith.mulf %133, %130 : vector<8x256xf32>
    %135 = arith.select %132, %130, %134 : vector<8x256xi1>, vector<8x256xf32>
    %c0_152 = arith.constant 0 : index
    %c0_153 = arith.constant 0 : index
    %c0_154 = arith.constant 0 : index
    %136 = vector.load %arg8[%c0_152, %c0_153, %c0_154] : memref<1x8x256xf32, #tpu.memory_space<vmem>>, vector<1x8x256xf32>
    %137 = vector.shape_cast %136 : vector<1x8x256xf32> to vector<8x256xf32>
    %138 = vector.shape_cast %135 : vector<8x256xf32> to vector<1x8x256xf32>
    tpu.vector_store %arg8[%c0_152, %c0_153, %c0_154], %138 {strides = array<i32>} : memref<1x8x256xf32, #tpu.memory_space<vmem>>, vector<1x8x256xf32>,
    return
  }
  func.func @transform_0(%arg0: i32) -> (i32, i32, i32) {
    %c0_i32 = arith.constant 0 : i32
    %c0_i32_0 = arith.constant 0 : i32
    %c0_i32_1 = arith.constant 0 : i32
    return %arg0, %c0_i32, %c0_i32_0 : i32, i32, i32
  }
  func.func @transform_1(%arg0: i32) -> (i32, i32) {
    %c0_i32 = arith.constant 0 : i32
    %c0_i32_0 = arith.constant 0 : i32
    %c0_i32_1 = arith.constant 0 : i32
    return %c0_i32, %c0_i32_0 : i32, i32
  }
  func.func @transform_2(%arg0: i32) -> (i32, i32) {
    %c0_i32 = arith.constant 0 : i32
    %c0_i32_0 = arith.constant 0 : i32
    %c0_i32_1 = arith.constant 0 : i32
    return %c0_i32, %c0_i32_0 : i32, i32
  }
  func.func @transform_3(%arg0: i32) -> (i32, i32) {
    %c0_i32 = arith.constant 0 : i32
    %c0_i32_0 = arith.constant 0 : i32
    %c0_i32_1 = arith.constant 0 : i32
    return %c0_i32, %c0_i32_0 : i32, i32
  }
  func.func @transform_4(%arg0: i32) -> (i32, i32) {
    %c0_i32 = arith.constant 0 : i32
    %c0_i32_0 = arith.constant 0 : i32
    %c0_i32_1 = arith.constant 0 : i32
    return %c0_i32, %c0_i32_0 : i32, i32
  }
  func.func @transform_5(%arg0: i32) -> (i32, i32) {
    %c0_i32 = arith.constant 0 : i32
    %c0_i32_0 = arith.constant 0 : i32
    %c0_i32_1 = arith.constant 0 : i32
    return %c0_i32, %c0_i32_0 : i32, i32
  }
  func.func @transform_6(%arg0: i32) -> (i32, i32) {
    %c0_i32 = arith.constant 0 : i32
    %c0_i32_0 = arith.constant 0 : i32
    %c0_i32_1 = arith.constant 0 : i32
    return %c0_i32, %c0_i32_0 : i32, i32
  }
  func.func @transform_7(%arg0: i32) -> (i32, i32, i32) {
    %c0_i32 = arith.constant 0 : i32
    %c0_i32_0 = arith.constant 0 : i32
    %c0_i32_1 = arith.constant 0 : i32
    return %arg0, %c0_i32, %c0_i32_0 : i32, i32, i32
  }
}

</mosaic_0001>

<llo_original>
// kernel: tpu_custom_call.1
$region0: #{tpu_custom_call.1}
  #allocation0 [shape = 'u32[]', space=smem, size = 0x4, offset = 0x4, fixed_abs, tag = 'smem constant byte address 0x4 - core index']
  #allocation1 [shape = 'u32[144,128]{1,0:T(1,128)}', space=vmem, size = 0x12000, scoped, tag = 'internal scratch']
  #allocation2 [shape = 'f32[36,256]{1,0:T(8,128)}', space=vmem, size = 0xa000, scoped, tag = 'scratch operand']
  #allocation3 [shape = 'f32[72,256]{1,0:T(8,128)}', space=vmem, size = 0x12000, scoped, tag = 'scratch operand']
  #allocation4 [shape = 'f32[8,256]{1,0:T(8,128)}', space=vmem, size = 0x2000, scoped, tag = 'scratch operand']
  %s0 = inlined_call_operand.vmem [shape: f32[2,4,256], index: 0, kind: input, shape index: {}]
  %s1 = inlined_call_operand.hbm [shape: f32[8,36], index: 1, kind: input, shape index: {}]
  %s2 = inlined_call_operand.vmem [shape: f32[8,1], index: 2, kind: input, shape index: {}]
  %s3 = inlined_call_operand.hbm [shape: f32[8,72], index: 3, kind: input, shape index: {}]
  %s4 = inlined_call_operand.vmem [shape: f32[8,1], index: 4, kind: input, shape index: {}]
  %s5 = inlined_call_operand.vmem [shape: f32[1,256], index: 5, kind: input, shape index: {}]
  %s6 = inlined_call_operand.vmem [shape: f32[1,256], index: 6, kind: input, shape index: {}]
  %s7 = inlined_call_operand.hbm [shape: f32[2,8,256], index: 7, kind: output, shape index: {}]
  %s8 = sld [smem:[#allocation0]]
  $region69: #{tpu_custom_call.1} parent=0
    _
  %s10 = ssub.s32 1, %s8
  %s11 = scalar_select 0, %s10, %s8
  $region1: #{tpu_custom_call.1} parent=0
    #allocation5 [shape = 'u8[4096]{0}', space=vmem, size = 0x1000, scoped, tag = 'input window, operand 1, single buffered']
    #allocation6 [shape = 's32[2]{0}', space=sflag, size = 0x8, scoped, tag = 'scoped memory for tpu_custom_call.1']
    #allocation7 [shape = 's32[2]{0}', space=sflag, size = 0x8, scoped, tag = 'scoped memory for tpu_custom_call.1']
    #allocation8 [shape = 'u8[4096]{0}', space=vmem, size = 0x1000, scoped, tag = 'input window, operand 3, single buffered']
    #allocation9 [shape = 's32[1]{0}', space=sflag, size = 0x4, scoped, tag = 'scoped memory for tpu_custom_call.1']
    #allocation10 [shape = 'u8[16384]{0}', space=vmem, size = 0x4000, scoped, tag = 'output window, operand 0']
    %12 = vsyncpa [#allocation6], 0
    %13 = vsyncpa [#allocation9], 0
    %14 = vsyncpa [#allocation7], 0
    %s15 = scalar_lea.sflag [#allocation7], 1
    %16 = vsyncpa %s15, 0
    loop: start=0, step=1, limit=4
    $region2: #{tpu_custom_call.1} parent=1 // loop_pre_header
      _
    $region3: #{tpu_custom_call.1} parent=1 // loop_header
      %s18 = sphi 0, %s22
      %p19 = scmp.ge.s32.totalorder %s18, 4
      %s28 = sphi 0, %s30
      %s31 = sphi 0, %s28
      %s32 = sphi 0, %s31
      %s48 = sphi 0, %s32
      %s52 = sphi 0, %s52
      %s54 = sphi 0, %s52
      %s55 = sphi 0, %s54
      %s69 = sphi 0, %s55
      %s73 = sphi 0, %s73
      %s75 = sphi 0, %s73
      %s76 = sphi 0, %s75
      %s90 = sphi 0, %s76
      %s94 = sphi 0, %s94
      %s96 = sphi 0, %s94
      %s97 = sphi 0, %s96
      %s111 = sphi 0, %s97
      %s115 = sphi 0, %s115
      %s117 = sphi 0, %s115
      %s118 = sphi 0, %s117
      %s132 = sphi 0, %s118
      %s136 = sphi 0, %s136
      %s138 = sphi 0, %s136
      %s139 = sphi 0, %s138
      %s153 = sphi 0, %s139
      %s157 = sphi 0, %s157
      %s159 = sphi 0, %s157
      %s160 = sphi 0, %s159
      %s174 = sphi 0, %s160
      %s180 = sphi 0, %s182
      %s183 = sphi 0, %s180
      %s184 = sphi 0, %s183
      %s200 = sphi 0, %s184
    $region4: #{tpu_custom_call.1} parent=1 // loop_header_branch
      %21 = sbr.rel (%p19) target = $region8
    $region5: #{tpu_custom_call.1} parent=1 // loop_body
      %s23 = ssub.s32 %s18, 1
      %s24 = ssub.s32 %s18, 2
      %s25 = sadd.s32 %s18, 1
      %s26 = ssub.s32 %s18, %s25
      %p27 = scmp.eq.s32.totalorder %s26, 0
      %s29 = sadd.s32 %s28, 1
      %s30 = scalar_select %p27, %s28, %s29
      %p33 = pneg %p27
      %p34 = scmp.eq.s32.totalorder %s18, 1
      %p35 = por %p33, %p34
      %p36 = scmp.ne.s32.totalorder %s28, %s31
      %p37 = scmp.eq.s32.totalorder %s18, 0
      %p38 = por %p36, %p37
      %p39 = scmp.ne.s32.totalorder %s28, %s31
      %p40 = scmp.eq.s32.totalorder %s23, 1
      %p41 = por %p39, %p40
      %p42 = scmp.ne.s32.totalorder %s31, %s32
      %p43 = scmp.eq.s32.totalorder %s23, 0
      %p44 = por %p42, %p43
      %p45 = scmp.ne.s32.totalorder %s31, %s32
      %p46 = scmp.eq.s32.totalorder %s24, 1
      %p47 = por %p45, %p46
      %p49 = scmp.ne.s32.totalorder %s32, %s48
      %p50 = scmp.eq.s32.totalorder %s24, 0
      %p51 = por %p49, %p50
      %s53 = sadd.s32 %s52, 1
      %p56 = scmp.eq.s32.totalorder %s18, 1
      %p57 = scmp.ne.s32.totalorder %s52, %s54
      %p58 = scmp.eq.s32.totalorder %s18, 0
      %p59 = por %p57, %p58
      %p60 = scmp.ne.s32.totalorder %s52, %s54
      %p61 = scmp.eq.s32.totalorder %s23, 1
      %p62 = por %p60, %p61
      %p63 = scmp.ne.s32.totalorder %s54, %s55
      %p64 = scmp.eq.s32.totalorder %s23, 0
      %p65 = por %p63, %p64
      %p66 = scmp.ne.s32.totalorder %s54, %s55
      %p67 = scmp.eq.s32.totalorder %s24, 1
      %p68 = por %p66, %p67
      %p70 = scmp.ne.s32.totalorder %s55, %s69
      %p71 = scmp.eq.s32.totalorder %s24, 0
      %p72 = por %p70, %p71
      %s74 = sadd.s32 %s73, 1
      %p77 = scmp.eq.s32.totalorder %s18, 1
      %p78 = scmp.ne.s32.totalorder %s73, %s75
      %p79 = scmp.eq.s32.totalorder %s18, 0
      %p80 = por %p78, %p79
      %p81 = scmp.ne.s32.totalorder %s73, %s75
      %p82 = scmp.eq.s32.totalorder %s23, 1
      %p83 = por %p81, %p82
      %p84 = scmp.ne.s32.totalorder %s75, %s76
      %p85 = scmp.eq.s32.totalorder %s23, 0
      %p86 = por %p84, %p85
      %p87 = scmp.ne.s32.totalorder %s75, %s76
      %p88 = scmp.eq.s32.totalorder %s24, 1
      %p89 = por %p87, %p88
      %p91 = scmp.ne.s32.totalorder %s76, %s90
      %p92 = scmp.eq.s32.totalorder %s24, 0
      %p93 = por %p91, %p92
      %s95 = sadd.s32 %s94, 1
      %p98 = scmp.eq.s32.totalorder %s18, 1
      %p99 = scmp.ne.s32.totalorder %s94, %s96
      %p100 = scmp.eq.s32.totalorder %s18, 0
      %p101 = por %p99, %p100
      %p102 = scmp.ne.s32.totalorder %s94, %s96
      %p103 = scmp.eq.s32.totalorder %s23, 1
      %p104 = por %p102, %p103
      %p105 = scmp.ne.s32.totalorder %s96, %s97
      %p106 = scmp.eq.s32.totalorder %s23, 0
      %p107 = por %p105, %p106
      %p108 = scmp.ne.s32.totalorder %s96, %s97
      %p109 = scmp.eq.s32.totalorder %s24, 1
      %p110 = por %p108, %p109
      %p112 = scmp.ne.s32.totalorder %s97, %s111
      %p113 = scmp.eq.s32.totalorder %s24, 0
      %p114 = por %p112, %p113
      %s116 = sadd.s32 %s115, 1
      %p119 = scmp.eq.s32.totalorder %s18, 1
      %p120 = scmp.ne.s32.totalorder %s115, %s117
      %p121 = scmp.eq.s32.totalorder %s18, 0
      %p122 = por %p120, %p121
      %p123 = scmp.ne.s32.totalorder %s115, %s117
      %p124 = scmp.eq.s32.totalorder %s23, 1
      %p125 = por %p123, %p124
      %p126 = scmp.ne.s32.totalorder %s117, %s118
      %p127 = scmp.eq.s32.totalorder %s23, 0
      %p128 = por %p126, %p127
      %p129 = scmp.ne.s32.totalorder %s117, %s118
      %p130 = scmp.eq.s32.totalorder %s24, 1
      %p131 = por %p129, %p130
      %p133 = scmp.ne.s32.totalorder %s118, %s132
      %p134 = scmp.eq.s32.totalorder %s24, 0
      %p135 = por %p133, %p134
      %s137 = sadd.s32 %s136, 1
      %p140 = scmp.eq.s32.totalorder %s18, 1
      %p141 = scmp.ne.s32.totalorder %s136, %s138
      %p142 = scmp.eq.s32.totalorder %s18, 0
      %p143 = por %p141, %p142
      %p144 = scmp.ne.s32.totalorder %s136, %s138
      %p145 = scmp.eq.s32.totalorder %s23, 1
      %p146 = por %p144, %p145
      %p147 = scmp.ne.s32.totalorder %s138, %s139
      %p148 = scmp.eq.s32.totalorder %s23, 0
      %p149 = por %p147, %p148
      %p150 = scmp.ne.s32.totalorder %s138, %s139
      %p151 = scmp.eq.s32.totalorder %s24, 1
      %p152 = por %p150, %p151
      %p154 = scmp.ne.s32.totalorder %s139, %s153
      %p155 = scmp.eq.s32.totalorder %s24, 0
      %p156 = por %p154, %p155
      %s158 = sadd.s32 %s157, 1
      %p161 = scmp.eq.s32.totalorder %s18, 1
      %p162 = scmp.ne.s32.totalorder %s157, %s159
      %p163 = scmp.eq.s32.totalorder %s18, 0
      %p164 = por %p162, %p163
      %p165 = scmp.ne.s32.totalorder %s157, %s159
      %p166 = scmp.eq.s32.totalorder %s23, 1
      %p167 = por %p165, %p166
      %p168 = scmp.ne.s32.totalorder %s159, %s160
      %p169 = scmp.eq.s32.totalorder %s23, 0
      %p170 = por %p168, %p169
      %p171 = scmp.ne.s32.totalorder %s159, %s160
      %p172 = scmp.eq.s32.totalorder %s24, 1
      %p173 = por %p171, %p172
      %p175 = scmp.ne.s32.totalorder %s160, %s174
      %p176 = scmp.eq.s32.totalorder %s24, 0
      %p177 = por %p175, %p176
      %s178 = ssub.s32 %s18, %s25
      %p179 = scmp.eq.s32.totalorder %s178, 0
      %s181 = sadd.s32 %s180, 1
      %s182 = scalar_select %p179, %s180, %s181
      %p185 = pneg %p179
      %p186 = scmp.eq.s32.totalorder %s18, 1
      %p187 = por %p185, %p186
      %p188 = scmp.ne.s32.totalorder %s180, %s183
      %p189 = scmp.eq.s32.totalorder %s18, 0
      %p190 = por %p188, %p189
      %p191 = scmp.ne.s32.totalorder %s180, %s183
      %p192 = scmp.eq.s32.totalorder %s23, 1
      %p193 = por %p191, %p192
      %p194 = scmp.ne.s32.totalorder %s183, %s184
      %p195 = scmp.eq.s32.totalorder %s23, 0
      %p196 = por %p194, %p195
      %p197 = scmp.ne.s32.totalorder %s183, %s184
      %p198 = scmp.eq.s32.totalorder %s24, 1
      %p199 = por %p197, %p198
      %p201 = scmp.ne.s32.totalorder %s184, %s200
      %p202 = scmp.eq.s32.totalorder %s24, 0
      %p203 = por %p201, %p202
      %p204 = scmp.le.s32.totalorder 1, %s18
      %p205 = scmp.lt.s32.totalorder %s18, 3
      %p206 = pnand %p204, %p205
      %p207 = pneg %p206
      // Predicated region
      $region9: #{tpu_custom_call.1} parent=5 // pred_check
        _
      $region10: #{tpu_custom_call.1} parent=5 // pred_check_branch
        %209 = sbr.rel (%p206) target = $region12
      $region11: #{tpu_custom_call.1} parent=5 // pred_region
        %s210 = ssub.s32 %s18, 1
        // Predicated region
        $region13: #{tpu_custom_call.1} parent=11 // pred_check
          %p211 = pneg %p65
        $region14: #{tpu_custom_call.1} parent=11 // pred_check_branch
          %213 = sbr.rel (%p211) target = $region16
        $region15: #{tpu_custom_call.1} parent=11 // pred_region
          %s215 = ssub.s32 128, 128
          %216 = vsyncadd [#allocation6], %s215
          %s218 = sshll.u32 [#allocation5], 4
          %s219 = int_to_ptr.vmem [resolvable:$true] %s218
          %221 = dma.hbm_to_vmem [thread:$0]  %s1, 128, %s219, [#allocation6]
        $region16: #{tpu_custom_call.1} parent=11 // pred_fallthru
          _
        // Predicated region
        $region17: #{tpu_custom_call.1} parent=11 // pred_check
          %p222 = pneg %p86
        $region18: #{tpu_custom_call.1} parent=11 // pred_check_branch
          %224 = sbr.rel (%p222) target = $region20
        $region19: #{tpu_custom_call.1} parent=11 // pred_region
          _
        $region20: #{tpu_custom_call.1} parent=11 // pred_fallthru
          _
        // Predicated region
        $region21: #{tpu_custom_call.1} parent=11 // pred_check
          %p225 = pneg %p107
        $region22: #{tpu_custom_call.1} parent=11 // pred_check_branch
          %227 = sbr.rel (%p225) target = $region24
        $region23: #{tpu_custom_call.1} parent=11 // pred_region
          %s229 = ssub.s32 128, 128
          %230 = vsyncadd [#allocation9], %s229
          %s232 = sshll.u32 [#allocation8], 4
          %s233 = int_to_ptr.vmem [resolvable:$true] %s232
          %235 = dma.hbm_to_vmem [thread:$0]  %s3, 128, %s233, [#allocation9]
        $region24: #{tpu_custom_call.1} parent=11 // pred_fallthru
          _
        // Predicated region
        $region25: #{tpu_custom_call.1} parent=11 // pred_check
          %p236 = pneg %p128
        $region26: #{tpu_custom_call.1} parent=11 // pred_check_branch
          %238 = sbr.rel (%p236) target = $region28
        $region27: #{tpu_custom_call.1} parent=11 // pred_region
          _
        $region28: #{tpu_custom_call.1} parent=11 // pred_fallthru
          _
        // Predicated region
        $region29: #{tpu_custom_call.1} parent=11 // pred_check
          %p239 = pneg %p149
        $region30: #{tpu_custom_call.1} parent=11 // pred_check_branch
          %241 = sbr.rel (%p239) target = $region32
        $region31: #{tpu_custom_call.1} parent=11 // pred_region
          _
        $region32: #{tpu_custom_call.1} parent=11 // pred_fallthru
          _
        // Predicated region
        $region33: #{tpu_custom_call.1} parent=11 // pred_check
          %p242 = pneg %p170
        $region34: #{tpu_custom_call.1} parent=11 // pred_check_branch
          %244 = sbr.rel (%p242) target = $region36
        $region35: #{tpu_custom_call.1} parent=11 // pred_region
          _
        $region36: #{tpu_custom_call.1} parent=11 // pred_fallthru
          _
      $region12: #{tpu_custom_call.1} parent=5 // pred_fallthru
        _
      %p245 = scmp.lt.s32.totalorder %s18, 2
      // Predicated region
      $region37: #{tpu_custom_call.1} parent=5 // pred_check
        %p246 = pneg %p245
      $region38: #{tpu_custom_call.1} parent=5 // pred_check_branch
        %248 = sbr.rel (%p246) target = $region40
      $region39: #{tpu_custom_call.1} parent=5 // pred_region
        // Predicated region
        $region41: #{tpu_custom_call.1} parent=39 // pred_check
          %p249 = pneg %p38
        $region42: #{tpu_custom_call.1} parent=39 // pred_check_branch
          %251 = sbr.rel (%p249) target = $region44
        $region43: #{tpu_custom_call.1} parent=39 // pred_region
          %p252 = scmp.lt.s32.totalorder %s18, 1
          %s253 = scalar_select %p252, %s18, 1
          %s254 = smul.addr %s253, 2
          %s255 = smul.addr %s254, 4
          %s256 = scalar_lea.vmem %s0, %s255
        $region44: #{tpu_custom_call.1} parent=39 // pred_fallthru
          _
      $region40: #{tpu_custom_call.1} parent=5 // pred_fallthru
        _
      %p257 = scmp.le.s32.totalorder 1, %s18
      %p258 = scmp.lt.s32.totalorder %s18, 3
      %p259 = pnand %p257, %p258
      %p260 = pneg %p259
      // Predicated region
      $region45: #{tpu_custom_call.1} parent=5 // pred_check
        _
      $region46: #{tpu_custom_call.1} parent=5 // pred_check_branch
        %262 = sbr.rel (%p259) target = $region48
      $region47: #{tpu_custom_call.1} parent=5 // pred_region
        %s263 = ssub.s32 %s18, 1
        // Predicated region
        $region49: #{tpu_custom_call.1} parent=47 // pred_check
          %p264 = pneg %p65
        $region50: #{tpu_custom_call.1} parent=47 // pred_check_branch
          %266 = sbr.rel (%p264) target = $region52
        $region51: #{tpu_custom_call.1} parent=47 // pred_region
          %267 = dma.done [#allocation6], 128
        $region52: #{tpu_custom_call.1} parent=47 // pred_fallthru
          _
        // Predicated region
        $region53: #{tpu_custom_call.1} parent=47 // pred_check
          %p268 = pneg %p107
        $region54: #{tpu_custom_call.1} parent=47 // pred_check_branch
          %270 = sbr.rel (%p268) target = $region56
        $region55: #{tpu_custom_call.1} parent=47 // pred_region
          %271 = dma.done [#allocation9], 128
        $region56: #{tpu_custom_call.1} parent=47 // pred_fallthru
          _
        %p272 = scmp.lt.s32.totalorder %s23, 1
        %s273 = scalar_select %p272, %s23, 1
        %s274 = smul.addr %s273, 2
        %s275 = smul.addr %s274, 4
        %s276 = scalar_lea.vmem %s0, %s275
        %p277 = pneg %p44
        %p278 = pneg %p41
        %p279 = pneg %p65
        %p280 = pneg %p62
        %p281 = pneg %p86
        %p282 = pneg %p83
        %p283 = pneg %p107
        %p284 = pneg %p104
        %p285 = pneg %p128
        %p286 = pneg %p125
        %p287 = pneg %p149
        %p288 = pneg %p146
        %p289 = pneg %p170
        %p290 = pneg %p167
        %p291 = pneg %p196
        %p292 = pneg %p193
        %s293 = sand.u32 %s183, 1
        %s294 = scalar_lea.sflag [#allocation7], %s293
        %s295 = sand.u32 %s183, 1
        %s296 = smul.addr %s295, 16
        %s297 = scalar_lea.vmem [#allocation10], %s296
        %p298 = scmp.lt.s32.totalorder %s23, 1
        %s299 = scalar_select %p298, %s23, 1
        %s300 = smul.addr %s299, 2
        %s301 = smul.addr %s300, 4
        %s302 = scalar_lea.vmem %s0, %s301
        %v303 = vld [vmem:[%s302] sm:$0xff]
        %v304 = vld [vmem:[%s5] sm:$0x3]
        %v306 = vlaneseq
        %v307 = vshrl.u32 %v306, 7
        %v308 = vsub.s32 0, %v307
        %v309 = vrot.slane %v304, %v308
        %v310 = vlaneseq
        %v311 = vshrl.u32 %v310, 7
        %v312 = vsub.s32 1, %v311
        %v313 = vrot.slane %v304, %v312
        %v314 = vcombine.low %v309, %v313
        %315 = vrot.lane.b32.xlu0 %v314, 111
        %v316 = vpop.permute.xlu0 %315
        %v317 = vrot.slane %v316, 4
        %vm318 = vcmask 908288
        %v319 = vsel %vm318, %v316, %v317
        %v321 = vmul.f32 %v303, %v319
        %v323 = vcombine.high %v321, %v321
        %324 = vrot.lane.b32.xlu0 %v321, 17
        %v325 = vpop.permute.xlu0 %324
        %326 = vrot.lane.b32.xlu0 %v323, 17
        %v327 = vpop.permute.xlu0 %326
        %vm328 = vcmask 138240
        %v329 = vsel %vm328, %v325, %v327
        %vm332 = vcmask 1043592
        %333 = vst.msk [vmem:[#allocation2] sm:$0xf] %vm332, %v325
        %334 = vst [vmem:[#allocation2 + $0x8] sm:$0xf] %v329
        %vm335 = vcmask 134144
        %336 = vst.msk [vmem:[#allocation2] sm:$0xf] %vm335, 0.0
        %v337 = vld [vmem:[%s302] sm:$0xff]
        %v339 = vcombine.low %v337, %v337
        %340 = vrot.lane.b32.xlu0 %v339, 16
        %v341 = vpop.permute.xlu0 %340
        %342 = vrot.lane.b32.xlu0 %v337, 16
        %v343 = vpop.permute.xlu0 %342
        %vm344 = vcmask 130048
        %v345 = vsel %vm344, %v341, %v343
        %vm348 = vcmask 1047684
        %349 = vst.msk [vmem:[#allocation2] sm:$0xf0] %vm348, %v341
        %350 = vst [vmem:[#allocation2 + $0x8] sm:$0xf0] %v345
        %vm351 = vcmask 130052
        %352 = vst.msk [vmem:[#allocation2] sm:$0xf0] %vm351, 0.0
        %v353 = vld [vmem:[%s302] sm:$0xff]
        %v354 = vld [vmem:[%s6] sm:$0x3]
        %v356 = vlaneseq
        %v357 = vshrl.u32 %v356, 7
        %v358 = vsub.s32 0, %v357
        %v359 = vrot.slane %v354, %v358
        %v360 = vlaneseq
        %v361 = vshrl.u32 %v360, 7
        %v362 = vsub.s32 1, %v361
        %v363 = vrot.slane %v354, %v362
        %v364 = vcombine.low %v359, %v363
        %365 = vrot.lane.b32.xlu0 %v364, 113
        %v366 = vpop.permute.xlu0 %365
        %v367 = vrot.slane %v366, 4
        %vm368 = vcmask 924672
        %v369 = vsel %vm368, %v366, %v367
        %v371 = vmul.f32 %v353, %v369
        %v373 = vcombine.high %v371, %v371
        %374 = vrot.lane.b32.xlu0 %v371, 15
        %v375 = vpop.permute.xlu0 %374
        %376 = vrot.lane.b32.xlu0 %v373, 15
        %v377 = vpop.permute.xlu0 %376
        %vm378 = vcmask 121856
        %v379 = vsel %vm378, %v375, %v377
        %vm382 = vcmask 1043576
        %383 = vst.msk [vmem:[#allocation2 + $0x10] sm:$0xf] %vm382, %v375
        %384 = vst [vmem:[#allocation2 + $0x18] sm:$0xf] %v379
        %vm385 = vcmask 117760
        %386 = vst.msk [vmem:[#allocation2 + $0x10] sm:$0xf] %vm385, 0.0
        %v387 = vld [vmem:[%s302] sm:$0xff]
        %v388 = vld [vmem:[%s5] sm:$0x3]
        %v390 = vlaneseq
        %v391 = vshrl.u32 %v390, 7
        %v392 = vsub.s32 0, %v391
        %v393 = vrot.slane %v388, %v392
        %v394 = vlaneseq
        %v395 = vshrl.u32 %v394, 7
        %v396 = vsub.s32 1, %v395
        %v397 = vrot.slane %v388, %v396
        %v398 = vcombine.low %v393, %v397
        %399 = vrot.lane.b32.xlu0 %v398, 127
        %v400 = vpop.permute.xlu0 %399
        %v401 = vrot.slane %v400, 4
        %vm402 = vcmask 1039360
        %v403 = vsel %vm402, %v400, %v401
        %v405 = vmul.f32 %v387, %v403
        %v407 = vcombine.low %v405, %v405
        %408 = vrot.lane.b32.xlu0 %v407, 1
        %v409 = vpop.permute.xlu0 %408
        %410 = vrot.lane.b32.xlu0 %v405, 1
        %v411 = vpop.permute.xlu0 %410
        %vm412 = vcmask 7168
        %v413 = vsel %vm412, %v409, %v411
        %vm416 = vcmask 1047564
        %417 = vst.msk [vmem:[#allocation2 + $0x10] sm:$0xf0] %vm416, %v409
        %418 = vst [vmem:[#allocation2 + $0x18] sm:$0xf0] %v413
        %vm419 = vcmask 7172
        %420 = vst.msk [vmem:[#allocation2 + $0x10] sm:$0xf0] %vm419, 0.0
        %v421 = vld [vmem:[%s302] sm:$0xff]
        %v423 = vcombine.high %v421, %v421
        %425 = vst [vmem:[#allocation2 + $0x20] sm:$0xf] %v421
        %426 = vst [vmem:[#allocation2 + $0x28] sm:$0xf] %v423
        %v427 = vld [vmem:[%s302] sm:$0xff]
        %v428 = vld [vmem:[%s6] sm:$0x3]
        %v430 = vlaneseq
        %v431 = vshrl.u32 %v430, 7
        %v432 = vsub.s32 0, %v431
        %v433 = vrot.slane %v428, %v432
        %v434 = vlaneseq
        %v435 = vshrl.u32 %v434, 7
        %v436 = vsub.s32 1, %v435
        %v437 = vrot.slane %v428, %v436
        %v438 = vcombine.low %v433, %v437
        %439 = vrot.lane.b32.xlu0 %v438, 1
        %v440 = vpop.permute.xlu0 %439
        %v441 = vrot.slane %v440, 4
        %v442 = vsel %vm412, %v441, %v440
        %v444 = vmul.f32 %v427, %v442
        %v446 = vcombine.low %v444, %v444
        %447 = vrot.lane.b32.xlu0 %v446, 127
        %v448 = vpop.permute.xlu0 %447
        %449 = vrot.lane.b32.xlu0 %v444, 127
        %v450 = vpop.permute.xlu0 %449
        %v451 = vsel %vm402, %v448, %v450
        %454 = vst [vmem:[#allocation2 + $0x20] sm:$0xf0] %v451
        %vm455 = vcmask 1039364
        %456 = vst.msk [vmem:[#allocation2 + $0x28] sm:$0xf0] %vm455, %v450
        %vm457 = vcmask 1048572
        %458 = vst.msk [vmem:[#allocation2 + $0x28] sm:$0xf0] %vm457, 0.0
        %v459 = vld [vmem:[%s302] sm:$0xff]
        %v460 = vld [vmem:[%s5] sm:$0x3]
        %v462 = vlaneseq
        %v463 = vshrl.u32 %v462, 7
        %v464 = vsub.s32 0, %v463
        %v465 = vrot.slane %v460, %v464
        %v466 = vlaneseq
        %v467 = vshrl.u32 %v466, 7
        %v468 = vsub.s32 1, %v467
        %v469 = vrot.slane %v460, %v468
        %v470 = vcombine.low %v465, %v469
        %471 = vrot.lane.b32.xlu0 %v470, 15
        %v472 = vpop.permute.xlu0 %471
        %v473 = vrot.slane %v472, 4
        %v474 = vsel %vm378, %v473, %v472
        %v476 = vmul.f32 %v459, %v474
        %v478 = vcombine.high %v476, %v476
        %479 = vrot.lane.b32.xlu0 %v476, 113
        %v480 = vpop.permute.xlu0 %479
        %481 = vrot.lane.b32.xlu0 %v478, 113
        %v482 = vpop.permute.xlu0 %481
        %v483 = vsel %vm368, %v480, %v482
        %486 = vst [vmem:[#allocation2 + $0x30] sm:$0xf] %v483
        %vm487 = vcmask 920576
        %488 = vst.msk [vmem:[#allocation2 + $0x38] sm:$0xf] %vm487, %v482
        %vm489 = vcmask 1044360
        %490 = vst.msk [vmem:[#allocation2 + $0x38] sm:$0xf] %vm489, 0.0
        %v491 = vld [vmem:[%s302] sm:$0xff]
        %v493 = vcombine.low %v491, %v491
        %494 = vrot.lane.b32.xlu0 %v493, 112
        %v495 = vpop.permute.xlu0 %494
        %496 = vrot.lane.b32.xlu0 %v491, 112
        %v497 = vpop.permute.xlu0 %496
        %vm498 = vcmask 916480
        %v499 = vsel %vm498, %v495, %v497
        %502 = vst [vmem:[#allocation2 + $0x30] sm:$0xf0] %v499
        %vm503 = vcmask 916484
        %504 = vst.msk [vmem:[#allocation2 + $0x38] sm:$0xf0] %vm503, %v497
        %vm505 = vcmask 1048452
        %506 = vst.msk [vmem:[#allocation2 + $0x38] sm:$0xf0] %vm505, 0.0
        %v507 = vld [vmem:[%s302] sm:$0xff]
        %v508 = vld [vmem:[%s6] sm:$0x3]
        %v510 = vlaneseq
        %v511 = vshrl.u32 %v510, 7
        %v512 = vsub.s32 0, %v511
        %v513 = vrot.slane %v508, %v512
        %v514 = vlaneseq
        %v515 = vshrl.u32 %v514, 7
        %v516 = vsub.s32 1, %v515
        %v517 = vrot.slane %v508, %v516
        %v518 = vcombine.low %v513, %v517
        %519 = vrot.lane.b32.xlu0 %v518, 17
        %v520 = vpop.permute.xlu0 %519
        %v521 = vrot.slane %v520, 4
        %v522 = vsel %vm328, %v521, %v520
        %v524 = vmul.f32 %v507, %v522
        %v526 = vcombine.high %v524, %v524
        %527 = vrot.lane.b32.xlu0 %v524, 111
        %v528 = vpop.permute.xlu0 %527
        %529 = vrot.lane.b32.xlu0 %v526, 111
        %v530 = vpop.permute.xlu0 %529
        %v531 = vsel %vm318, %v528, %v530
        %534 = vst [vmem:[#allocation2 + $0x40] sm:$0xf] %v531
        %vm535 = vcmask 904192
        %536 = vst.msk [vmem:[#allocation2 + $0x48] sm:$0xf] %vm535, %v530
        %vm537 = vcmask 1044344
        %538 = vst.msk [vmem:[#allocation2 + $0x48] sm:$0xf] %vm537, 0.0
        %v539 = vld [vmem:[#allocation5] sm:$0xff]
        %v540 = vld [vmem:[#allocation2] sm:$0xff]
        %v541 = vld [vmem:[#allocation2 + $0x8] sm:$0xff]
        %v542 = vld [vmem:[#allocation2 + $0x10] sm:$0xff]
        %v543 = vld [vmem:[#allocation2 + $0x18] sm:$0xff]
        %v544 = vld [vmem:[#allocation2 + $0x20] sm:$0xff]
        %v545 = vld [vmem:[#allocation2 + $0x28] sm:$0xff]
        %v546 = vld [vmem:[#allocation2 + $0x30] sm:$0xff]
        %v547 = vld [vmem:[#allocation2 + $0x38] sm:$0xff]
        %v548 = vld [vmem:[#allocation2 + $0x40] sm:$0xf]
        %v549 = vld [vmem:[#allocation2 + $0x48] sm:$0xf]
        %v550 = vld [vmem:[%s2] sm:$0xff]
        %552 = vset.pattern.permute.xlu0 0
        %553 = vperm.xlu0 %552, %v550
        %v554 = vpop.permute.xlu0 %553
        %vm556 = vcmask 293888
        %v558 = vsel %vm556, %v539, 0
        %vm560 = vcmask 1043456
        %v562 = vsel %vm560, %v548, 0
        %v565 = vsel %vm560, %v549, 0
        %567 = vmatprep.subr.mxu0 0.0
        %568 = vmatpush1.msra.mxu0 0.0
        %569 = vmatprep.subr.mxu0 0.0
        %570 = vmatpush1.msra.mxu0 0.0
        %571 = vmatprep.subr.mxu0 0.0
        %572 = vmatpush1.msra.mxu0 0.0
        %573 = vmatprep.subr.mxu0 0.0
        %574 = vmatpush1.msra.mxu0 0.0
        %575 = vmatprep.subr.mxu0 0.0
        %576 = vmatpush1.msra.mxu0 0.0
        %577 = vmatprep.subr.mxu0 0.0
        %578 = vmatpush1.msra.mxu0 0.0
        %579 = vmatprep.subr.mxu0 0.0
        %580 = vmatpush1.msra.mxu0 0.0
        %581 = vmatprep.subr.mxu0 0.0
        %582 = vmatpush1.msra.mxu0 0.0
        %583 = vmatprep.subr.mxu0 0.0
        %584 = vmatpush1.msra.mxu0 0.0
        %585 = vmatprep.subr.mxu0 0.0
        %586 = vmatpush1.msra.mxu0 0.0
        %587 = vmatprep.subr.mxu0 0.0
        %588 = vmatpush1.msra.mxu0 0.0
        %589 = vmatprep.subr.mxu0 %v565
        %590 = vmatpush1.msra.mxu0 %v562
        %591 = vmatprep.subr.mxu0 %v547
        %592 = vmatpush1.msra.mxu0 %v546
        %593 = vmatprep.subr.mxu0 %v545
        %594 = vmatpush1.msra.mxu0 %v544
        %595 = vmatprep.subr.mxu0 %v543
        %596 = vmatpush1.msra.mxu0 %v542
        %597 = vmatprep.subr.mxu0 %v541
        %598 = vmatpush1.msra.mxu0 %v540
        %599 = vmatprep.subr.mxu0 0.0
        %600 = vmatpush2.msra.mxu0 0.0
        %601 = vmatprep.subr.mxu0 0.0
        %602 = vmatpush2.msra.mxu0 0.0
        %603 = vmatprep.subr.mxu0 0.0
        %604 = vmatpush2.msra.mxu0 0.0
        %605 = vmatprep.subr.mxu0 0.0
        %606 = vmatpush2.msra.mxu0 0.0
        %607 = vmatprep.subr.mxu0 0.0
        %608 = vmatpush2.msra.mxu0 0.0
        %609 = vmatprep.subr.mxu0 0.0
        %610 = vmatpush2.msra.mxu0 0.0
        %611 = vmatprep.subr.mxu0 0.0
        %612 = vmatpush2.msra.mxu0 0.0
        %613 = vmatprep.subr.mxu0 0.0
        %614 = vmatpush2.msra.mxu0 0.0
        %615 = vmatprep.subr.mxu0 0.0
        %616 = vmatpush2.msra.mxu0 0.0
        %617 = vmatprep.subr.mxu0 0.0
        %618 = vmatpush2.msra.mxu0 0.0
        %619 = vmatprep.subr.mxu0 0.0
        %620 = vmatpush2.msra.mxu0 0.0
        %621 = vmatprep.subr.mxu0 0.0
        %622 = vmatpush2.msra.mxu0 0.0
        %623 = vmatprep.subr.mxu0 0.0
        %624 = vmatpush2.msra.mxu0 0.0
        %625 = vmatprep.subr.mxu0 0.0
        %626 = vmatpush2.msra.mxu0 0.0
        %627 = vmatprep.subr.mxu0 0.0
        %628 = vmatpush2.msra.mxu0 0.0
        %629 = vmatprep.subr.mxu0 0.0
        %630 = vmatpush2.msra.mxu0 0.0
        %631 = vmatprep.mubr.f32.mxu0 0.0
        %632 = vmatmul.mubr.f32.gmra.mxu0 %v558
        %v633 = vpop.f32.mrf.mxu0
        %v634 = vadd.f32 %v554, %v633
        %v635 = vpop.f32.mrf.mxu0
        %v636 = vadd.f32 %v554, %v635
        %637 = vdwg.mxu0
        %vm638 = vcmp.ge.f32.partialorder %v634, 0.0
        %vm639 = vcmp.ge.f32.partialorder %v636, 0.0
        %v640 = vmul.f32 %v634, 0.01
        %v641 = vmul.f32 %v636, 0.01
        %v642 = vsel %vm638, %v634, %v640
        %v643 = vsel %vm639, %v636, %v641
        %644 = vst [vmem:[#allocation4] sm:$0xff] %v642
        %645 = vst [vmem:[#allocation4 + $0x8] sm:$0xff] %v643
        %v646 = vld [vmem:[#allocation4] sm:$0xff]
        %v647 = vld [vmem:[#allocation4 + $0x8] sm:$0xff]
        %v648 = vld [vmem:[%s5] sm:$0x3]
        %v650 = vlaneseq
        %v651 = vshrl.u32 %v650, 7
        %v652 = vsub.s32 0, %v651
        %v653 = vrot.slane %v648, %v652
        %v654 = vlaneseq
        %v655 = vshrl.u32 %v654, 7
        %v656 = vsub.s32 1, %v655
        %v657 = vrot.slane %v648, %v656
        %658 = vrot.lane.b32.xlu0 %v653, 111
        %v659 = vpop.permute.xlu0 %658
        %660 = vrot.lane.b32.xlu0 %v657, 111
        %v661 = vpop.permute.xlu0 %660
        %v662 = vsel %vm318, %v659, %v661
        %v665 = vmul.f32 %v646, %v662
        %v666 = vmul.f32 %v647, %v661
        %669 = vrot.lane.b32.xlu0 %v665, 17
        %v670 = vpop.permute.xlu0 %669
        %671 = vrot.lane.b32.xlu0 %v666, 17
        %v672 = vpop.permute.xlu0 %671
        %v673 = vsel %vm328, %v670, %v672
        %vm676 = vcmask 1047688
        %677 = vst.msk [vmem:[#allocation3] sm:$0xff] %vm676, %v670
        %678 = vst [vmem:[#allocation3 + $0x8] sm:$0xff] %v673
        %679 = vst.msk [vmem:[#allocation3] sm:$0xff] %vm328, 0.0
        %v680 = vld [vmem:[#allocation4] sm:$0xff]
        %v681 = vld [vmem:[#allocation4 + $0x8] sm:$0xff]
        %684 = vrot.lane.b32.xlu0 %v680, 16
        %v685 = vpop.permute.xlu0 %684
        %686 = vrot.lane.b32.xlu0 %v681, 16
        %v687 = vpop.permute.xlu0 %686
        %v688 = vsel %vm344, %v685, %v687
        %vm691 = vcmask 1047680
        %692 = vst.msk [vmem:[#allocation3 + $0x10] sm:$0xff] %vm691, %v685
        %693 = vst [vmem:[#allocation3 + $0x18] sm:$0xff] %v688
        %694 = vst.msk [vmem:[#allocation3 + $0x10] sm:$0xff] %vm344, 0.0
        %v695 = vld [vmem:[#allocation4] sm:$0xff]
        %v696 = vld [vmem:[#allocation4 + $0x8] sm:$0xff]
        %v697 = vld [vmem:[%s6] sm:$0x3]
        %v699 = vlaneseq
        %v700 = vshrl.u32 %v699, 7
        %v701 = vsub.s32 0, %v700
        %v702 = vrot.slane %v697, %v701
        %v703 = vlaneseq
        %v704 = vshrl.u32 %v703, 7
        %v705 = vsub.s32 1, %v704
        %v706 = vrot.slane %v697, %v705
        %707 = vrot.lane.b32.xlu0 %v702, 113
        %v708 = vpop.permute.xlu0 %707
        %709 = vrot.lane.b32.xlu0 %v706, 113
        %v710 = vpop.permute.xlu0 %709
        %v711 = vsel %vm368, %v708, %v710
        %v714 = vmul.f32 %v695, %v711
        %v715 = vmul.f32 %v696, %v710
        %718 = vrot.lane.b32.xlu0 %v714, 15
        %v719 = vpop.permute.xlu0 %718
        %720 = vrot.lane.b32.xlu0 %v715, 15
        %v721 = vpop.permute.xlu0 %720
        %v722 = vsel %vm378, %v719, %v721
        %vm725 = vcmask 1047672
        %726 = vst.msk [vmem:[#allocation3 + $0x20] sm:$0xff] %vm725, %v719
        %727 = vst [vmem:[#allocation3 + $0x28] sm:$0xff] %v722
        %728 = vst.msk [vmem:[#allocation3 + $0x20] sm:$0xff] %vm378, 0.0
        %v729 = vld [vmem:[#allocation4] sm:$0xff]
        %v730 = vld [vmem:[#allocation4 + $0x8] sm:$0xff]
        %v731 = vld [vmem:[%s5] sm:$0x3]
        %v733 = vlaneseq
        %v734 = vshrl.u32 %v733, 7
        %v735 = vsub.s32 0, %v734
        %v736 = vrot.slane %v731, %v735
        %v737 = vlaneseq
        %v738 = vshrl.u32 %v737, 7
        %v739 = vsub.s32 1, %v738
        %v740 = vrot.slane %v731, %v739
        %741 = vrot.lane.b32.xlu0 %v736, 127
        %v742 = vpop.permute.xlu0 %741
        %743 = vrot.lane.b32.xlu0 %v740, 127
        %v744 = vpop.permute.xlu0 %743
        %v745 = vsel %vm402, %v742, %v744
        %v748 = vmul.f32 %v729, %v745
        %v749 = vmul.f32 %v730, %v744
        %752 = vrot.lane.b32.xlu0 %v748, 1
        %v753 = vpop.permute.xlu0 %752
        %754 = vrot.lane.b32.xlu0 %v749, 1
        %v755 = vpop.permute.xlu0 %754
        %v756 = vsel %vm412, %v753, %v755
        %vm759 = vcmask 1047560
        %760 = vst.msk [vmem:[#allocation3 + $0x30] sm:$0xff] %vm759, %v753
        %761 = vst [vmem:[#allocation3 + $0x38] sm:$0xff] %v756
        %762 = vst.msk [vmem:[#allocation3 + $0x30] sm:$0xff] %vm412, 0.0
        %v763 = vld [vmem:[#allocation4] sm:$0xff]
        %v764 = vld [vmem:[#allocation4 + $0x8] sm:$0xff]
        %765 = vst [vmem:[#allocation3 + $0x40] sm:$0xff] %v763
        %766 = vst [vmem:[#allocation3 + $0x48] sm:$0xff] %v764
        %v767 = vld [vmem:[#allocation4] sm:$0xff]
        %v768 = vld [vmem:[#allocation4 + $0x8] sm:$0xff]
        %v769 = vld [vmem:[%s6] sm:$0x3]
        %v771 = vlaneseq
        %v772 = vshrl.u32 %v771, 7
        %v773 = vsub.s32 0, %v772
        %v774 = vrot.slane %v769, %v773
        %v775 = vlaneseq
        %v776 = vshrl.u32 %v775, 7
        %v777 = vsub.s32 1, %v776
        %v778 = vrot.slane %v769, %v777
        %779 = vrot.lane.b32.xlu0 %v774, 1
        %v780 = vpop.permute.xlu0 %779
        %781 = vrot.lane.b32.xlu0 %v778, 1
        %v782 = vpop.permute.xlu0 %781
        %v783 = vsel %vm412, %v780, %v782
        %v786 = vmul.f32 %v767, %v780
        %v787 = vmul.f32 %v768, %v783
        %790 = vrot.lane.b32.xlu0 %v786, 127
        %v791 = vpop.permute.xlu0 %790
        %792 = vrot.lane.b32.xlu0 %v787, 127
        %v793 = vpop.permute.xlu0 %792
        %v794 = vsel %vm402, %v791, %v793
        %797 = vst [vmem:[#allocation3 + $0x50] sm:$0xff] %v794
        %798 = vst.msk [vmem:[#allocation3 + $0x58] sm:$0xff] %vm402, %v793
        %vm799 = vcmask 1048568
        %800 = vst.msk [vmem:[#allocation3 + $0x58] sm:$0xff] %vm799, 0.0
        %v801 = vld [vmem:[#allocation4] sm:$0xff]
        %v802 = vld [vmem:[#allocation4 + $0x8] sm:$0xff]
        %v803 = vld [vmem:[%s5] sm:$0x3]
        %v805 = vlaneseq
        %v806 = vshrl.u32 %v805, 7
        %v807 = vsub.s32 0, %v806
        %v808 = vrot.slane %v803, %v807
        %v809 = vlaneseq
        %v810 = vshrl.u32 %v809, 7
        %v811 = vsub.s32 1, %v810
        %v812 = vrot.slane %v803, %v811
        %813 = vrot.lane.b32.xlu0 %v808, 15
        %v814 = vpop.permute.xlu0 %813
        %815 = vrot.lane.b32.xlu0 %v812, 15
        %v816 = vpop.permute.xlu0 %815
        %v817 = vsel %vm378, %v814, %v816
        %v820 = vmul.f32 %v801, %v814
        %v821 = vmul.f32 %v802, %v817
        %824 = vrot.lane.b32.xlu0 %v820, 113
        %v825 = vpop.permute.xlu0 %824
        %826 = vrot.lane.b32.xlu0 %v821, 113
        %v827 = vpop.permute.xlu0 %826
        %v828 = vsel %vm368, %v825, %v827
        %831 = vst [vmem:[#allocation3 + $0x60] sm:$0xff] %v828
        %832 = vst.msk [vmem:[#allocation3 + $0x68] sm:$0xff] %vm368, %v827
        %vm833 = vcmask 1048456
        %834 = vst.msk [vmem:[#allocation3 + $0x68] sm:$0xff] %vm833, 0.0
        %v835 = vld [vmem:[#allocation4] sm:$0xff]
        %v836 = vld [vmem:[#allocation4 + $0x8] sm:$0xff]
        %839 = vrot.lane.b32.xlu0 %v835, 112
        %v840 = vpop.permute.xlu0 %839
        %841 = vrot.lane.b32.xlu0 %v836, 112
        %v842 = vpop.permute.xlu0 %841
        %v843 = vsel %vm498, %v840, %v842
        %846 = vst [vmem:[#allocation3 + $0x70] sm:$0xff] %v843
        %847 = vst.msk [vmem:[#allocation3 + $0x78] sm:$0xff] %vm498, %v842
        %vm848 = vcmask 1048448
        %849 = vst.msk [vmem:[#allocation3 + $0x78] sm:$0xff] %vm848, 0.0
        %v850 = vld [vmem:[#allocation4] sm:$0xff]
        %v851 = vld [vmem:[#allocation4 + $0x8] sm:$0xff]
        %v852 = vld [vmem:[%s6] sm:$0x3]
        %v854 = vlaneseq
        %v855 = vshrl.u32 %v854, 7
        %v856 = vsub.s32 0, %v855
        %v857 = vrot.slane %v852, %v856
        %v858 = vlaneseq
        %v859 = vshrl.u32 %v858, 7
        %v860 = vsub.s32 1, %v859
        %v861 = vrot.slane %v852, %v860
        %862 = vrot.lane.b32.xlu0 %v857, 17
        %v863 = vpop.permute.xlu0 %862
        %864 = vrot.lane.b32.xlu0 %v861, 17
        %v865 = vpop.permute.xlu0 %864
        %v866 = vsel %vm328, %v863, %v865
        %v869 = vmul.f32 %v850, %v863
        %v870 = vmul.f32 %v851, %v866
        %873 = vrot.lane.b32.xlu0 %v869, 111
        %v874 = vpop.permute.xlu0 %873
        %875 = vrot.lane.b32.xlu0 %v870, 111
        %v876 = vpop.permute.xlu0 %875
        %v877 = vsel %vm318, %v874, %v876
        %880 = vst [vmem:[#allocation3 + $0x80] sm:$0xff] %v877
        %881 = vst.msk [vmem:[#allocation3 + $0x88] sm:$0xff] %vm318, %v876
        %vm882 = vcmask 1048440
        %883 = vst.msk [vmem:[#allocation3 + $0x88] sm:$0xff] %vm882, 0.0
        %v884 = vld [vmem:[#allocation8] sm:$0xff]
        %v885 = vld [vmem:[#allocation3] sm:$0xff]
        %v886 = vld [vmem:[#allocation3 + $0x8] sm:$0xff]
        %v887 = vld [vmem:[#allocation3 + $0x10] sm:$0xff]
        %v888 = vld [vmem:[#allocation3 + $0x18] sm:$0xff]
        %v889 = vld [vmem:[#allocation3 + $0x20] sm:$0xff]
        %v890 = vld [vmem:[#allocation3 + $0x28] sm:$0xff]
        %v891 = vld [vmem:[#allocation3 + $0x30] sm:$0xff]
        %v892 = vld [vmem:[#allocation3 + $0x38] sm:$0xff]
        %v893 = vld [vmem:[#allocation3 + $0x40] sm:$0xff]
        %v894 = vld [vmem:[#allocation3 + $0x48] sm:$0xff]
        %v895 = vld [vmem:[#allocation3 + $0x50] sm:$0xff]
        %v896 = vld [vmem:[#allocation3 + $0x58] sm:$0xff]
        %v897 = vld [vmem:[#allocation3 + $0x60] sm:$0xff]
        %v898 = vld [vmem:[#allocation3 + $0x68] sm:$0xff]
        %v899 = vld [vmem:[#allocation3 + $0x70] sm:$0xff]
        %v900 = vld [vmem:[#allocation3 + $0x78] sm:$0xff]
        %v901 = vld [vmem:[#allocation3 + $0x80] sm:$0xff]
        %v902 = vld [vmem:[#allocation3 + $0x88] sm:$0xff]
        %v903 = vld [vmem:[%s4] sm:$0xff]
        %905 = vset.pattern.permute.xlu0 0
        %906 = vperm.xlu0 %905, %v903
        %v907 = vpop.permute.xlu0 %906
        %vm909 = vcmask 588800
        %v911 = vsel %vm909, %v884, 0
        %913 = vmatprep.subr.mxu0 0.0
        %914 = vmatpush1.msra.mxu0 0.0
        %915 = vmatprep.subr.mxu0 0.0
        %916 = vmatpush1.msra.mxu0 0.0
        %917 = vmatprep.subr.mxu0 0.0
        %918 = vmatpush1.msra.mxu0 0.0
        %919 = vmatprep.subr.mxu0 0.0
        %920 = vmatpush1.msra.mxu0 0.0
        %921 = vmatprep.subr.mxu0 0.0
        %922 = vmatpush1.msra.mxu0 0.0
        %923 = vmatprep.subr.mxu0 0.0
        %924 = vmatpush1.msra.mxu0 0.0
        %925 = vmatprep.subr.mxu0 0.0
        %926 = vmatpush1.msra.mxu0 0.0
        %927 = vmatprep.subr.mxu0 %v902
        %928 = vmatpush1.msra.mxu0 %v901
        %929 = vmatprep.subr.mxu0 %v900
        %930 = vmatpush1.msra.mxu0 %v899
        %931 = vmatprep.subr.mxu0 %v898
        %932 = vmatpush1.msra.mxu0 %v897
        %933 = vmatprep.subr.mxu0 %v896
        %934 = vmatpush1.msra.mxu0 %v895
        %935 = vmatprep.subr.mxu0 %v894
        %936 = vmatpush1.msra.mxu0 %v893
        %937 = vmatprep.subr.mxu0 %v892
        %938 = vmatpush1.msra.mxu0 %v891
        %939 = vmatprep.subr.mxu0 %v890
        %940 = vmatpush1.msra.mxu0 %v889
        %941 = vmatprep.subr.mxu0 %v888
        %942 = vmatpush1.msra.mxu0 %v887
        %943 = vmatprep.subr.mxu0 %v886
        %944 = vmatpush1.msra.mxu0 %v885
        %945 = vmatprep.subr.mxu0 0.0
        %946 = vmatpush2.msra.mxu0 0.0
        %947 = vmatprep.subr.mxu0 0.0
        %948 = vmatpush2.msra.mxu0 0.0
        %949 = vmatprep.subr.mxu0 0.0
        %950 = vmatpush2.msra.mxu0 0.0
        %951 = vmatprep.subr.mxu0 0.0
        %952 = vmatpush2.msra.mxu0 0.0
        %953 = vmatprep.subr.mxu0 0.0
        %954 = vmatpush2.msra.mxu0 0.0
        %955 = vmatprep.subr.mxu0 0.0
        %956 = vmatpush2.msra.mxu0 0.0
        %957 = vmatprep.subr.mxu0 0.0
        %958 = vmatpush2.msra.mxu0 0.0
        %959 = vmatprep.subr.mxu0 0.0
        %960 = vmatpush2.msra.mxu0 0.0
        %961 = vmatprep.subr.mxu0 0.0
        %962 = vmatpush2.msra.mxu0 0.0
        %963 = vmatprep.subr.mxu0 0.0
        %964 = vmatpush2.msra.mxu0 0.0
        %965 = vmatprep.subr.mxu0 0.0
        %966 = vmatpush2.msra.mxu0 0.0
        %967 = vmatprep.subr.mxu0 0.0
        %968 = vmatpush2.msra.mxu0 0.0
        %969 = vmatprep.subr.mxu0 0.0
        %970 = vmatpush2.msra.mxu0 0.0
        %971 = vmatprep.subr.mxu0 0.0
        %972 = vmatpush2.msra.mxu0 0.0
        %973 = vmatprep.subr.mxu0 0.0
        %974 = vmatpush2.msra.mxu0 0.0
        %975 = vmatprep.subr.mxu0 0.0
        %976 = vmatpush2.msra.mxu0 0.0
        %977 = vmatprep.mubr.f32.mxu0 0.0
        %978 = vmatmul.mubr.f32.gmra.mxu0 %v911
        %v979 = vpop.f32.mrf.mxu0
        %v980 = vadd.f32 %v907, %v979
        %v981 = vpop.f32.mrf.mxu0
        %v982 = vadd.f32 %v907, %v981
        %983 = vdwg.mxu0
        %vm984 = vcmp.ge.f32.partialorder %v980, 0.0
        %vm985 = vcmp.ge.f32.partialorder %v982, 0.0
        %v986 = vmul.f32 %v980, 0.01
        %v987 = vmul.f32 %v982, 0.01
        %v988 = vsel %vm984, %v980, %v986
        %v989 = vsel %vm985, %v982, %v987
        %990 = vst [vmem:[%s297] sm:$0xff] %v988
        %991 = vst [vmem:[%s297 + $0x8] sm:$0xff] %v989
        %s992 = sand.u32 %s183, 1
        %s993 = scalar_lea.sflag [#allocation7], %s992
        %s994 = sand.u32 %s183, 1
        %s995 = smul.addr %s994, 16
        %s996 = scalar_lea.vmem [#allocation10], %s995
        // Predicated region
        $region57: #{tpu_custom_call.1} parent=47 // pred_check
          %p997 = pneg %p193
        $region58: #{tpu_custom_call.1} parent=47 // pred_check_branch
          %999 = sbr.rel (%p997) target = $region60
        $region59: #{tpu_custom_call.1} parent=47 // pred_region
          %s1001 = ssub.s32 256, 256
          %1002 = vsyncadd %s993, %s1001
          %s1003 = smul.addr %s23, 2
          %s1004 = smul.addr %s1003, 128
          %s1005 = scalar_lea.hbm %s7, %s1004
          %s1007 = sshll.u32 %s996, 4
          %s1008 = int_to_ptr.vmem [resolvable:$true] %s1007
          %1010 = dma.vmem_to_hbm [thread:$0]  %s1008, 256, %s1005, %s993
        $region60: #{tpu_custom_call.1} parent=47 // pred_fallthru
          _
      $region48: #{tpu_custom_call.1} parent=5 // pred_fallthru
        _
      %p1011 = scmp.le.s32.totalorder 2, %s18
      // Predicated region
      $region61: #{tpu_custom_call.1} parent=5 // pred_check
        %p1012 = pneg %p1011
      $region62: #{tpu_custom_call.1} parent=5 // pred_check_branch
        %1014 = sbr.rel (%p1012) target = $region64
      $region63: #{tpu_custom_call.1} parent=5 // pred_region
        %s1015 = ssub.s32 %s18, 2
        // Predicated region
        $region65: #{tpu_custom_call.1} parent=63 // pred_check
          %p1016 = pneg %p199
        $region66: #{tpu_custom_call.1} parent=63 // pred_check_branch
          %1018 = sbr.rel (%p1016) target = $region68
        $region67: #{tpu_custom_call.1} parent=63 // pred_region
          %s1019 = sand.u32 %s184, 1
          %s1020 = scalar_lea.sflag [#allocation7], %s1019
          %s1021 = sand.u32 %s184, 1
          %s1022 = smul.addr %s1021, 16
          %s1023 = scalar_lea.vmem [#allocation10], %s1022
          %1024 = dma.done %s1020, 256
        $region68: #{tpu_custom_call.1} parent=63 // pred_fallthru
          _
      $region64: #{tpu_custom_call.1} parent=5 // pred_fallthru
        _
    $region6: #{tpu_custom_call.1} parent=1 // loop_footer
      %s22 = sadd.s32 1, %s18
    $region7: #{tpu_custom_call.1} parent=1 // loop_footer_branch
      %17 = sbr.rel target = $region3
    $region8: #{tpu_custom_call.1} parent=1 // loop_exit
      _
    %1025 = vsyncpa [#allocation6], 1
    %s1026 = scalar_lea.sflag [#allocation6], 1
    %1027 = vsyncpa %s1026, 1
    %1028 = vsyncpa [#allocation9], 1
    %1029 = vsyncpa [#allocation7], 1
    %s1030 = scalar_lea.sflag [#allocation7], 1
    %1031 = vsyncpa %s1030, 1

</llo_original>
